<compile_context>
chip_gen: v7x
topology: tpu7x:2x2x1
jax: 0.10.0
libtpu: 0.0.40
codegen_flags: <defaults>
</compile_context>

<pallas_src>
import functools

import jax
import jax.numpy as jnp
from jax.experimental import pallas as pl
from jax.experimental.pallas import tpu as pltpu


def _round_up(x, m):
    return ((x + m - 1) // m) * m


def _cdiv(a, b):
    return -(-a // b)


def actor_kernel(state_ref, zs_ref,
                 w0_ref, b0_ref,
                 w1a_ref, w1z_ref, b1_ref,
                 w2_ref, b2_ref,
                 w3_ref, b3_ref,
                 out_ref, *, bf16_relu):
    # MXU operands in bf16, accumulation in f32 (no-op cast if inputs are bf16).
    state_bf = state_ref[...].astype(jnp.bfloat16)
    zs_bf = zs_ref[...].astype(jnp.bfloat16)

    # l0: state -> hdim
    h0 = jnp.dot(state_bf, w0_ref[...],
                 preferred_element_type=jnp.float32) + b0_ref[...]

    # AvgL1Norm: x / clamp(mean(|x|, -1, keepdim=True), 1e-8)   (f32 math,
    # exact reciprocal to match PyTorch's division).
    denom = jnp.maximum(jnp.mean(jnp.abs(h0), axis=-1, keepdims=True), 1e-8)
    a = h0 * pl.reciprocal(denom, approx=False)

    # l1 on cat([a, zs], 1): weight split into a-part and zs-part so no
    # concatenation is materialized inside the kernel.
    h1 = (jnp.dot(a.astype(jnp.bfloat16), w1a_ref[...],
                  preferred_element_type=jnp.float32)
          + jnp.dot(zs_bf, w1z_ref[...],
                    preferred_element_type=jnp.float32)
          + b1_ref[...])
    if bf16_relu:
        # bf16 VALU (v6e/v7x): cast then max — identical result, half the
        # vreg traffic for the relu stage.
        h1 = jnp.maximum(h1.astype(jnp.bfloat16), 0.0)
    else:
        h1 = jnp.maximum(h1, 0.0).astype(jnp.bfloat16)

    # l2
    h2 = jnp.dot(h1, w2_ref[...],
                 preferred_element_type=jnp.float32) + b2_ref[...]
    if bf16_relu:
        h2 = jnp.maximum(h2.astype(jnp.bfloat16), 0.0)
    else:
        h2 = jnp.maximum(h2, 0.0).astype(jnp.bfloat16)

    # l3 (padded to a lane-dense width) + tanh; padded columns are exactly 0.
    out = jnp.tanh(
        jnp.dot(h2, w3_ref[...],
                preferred_element_type=jnp.float32) + b3_ref[...])
    out_ref[...] = out.astype(out_ref.dtype)


def _default_bf16_relu():
    """bf16 relu only on chips with a bf16 VALU (not v5e)."""
    try:
        kind = jax.devices()[0].device_kind.lower()
        return "v5" not in kind
    except Exception:  # pragma: no cover - detection best-effort only
        return False


def _choose_tb(B, block_b):
    """Pick the batch tile.

    Multiple of 8, <= block_b.  Prefers >=2 grid steps (v7x megacore split),
    an even step count (core load balance), minimal batch padding, and then
    the largest tile (fewest per-step overheads).
    """
    block_b = max(8, _round_up(block_b, 8))
    B8 = _round_up(B, 8)
    if B8 < 16:
        return min(B8, block_b)
    best = None
    max_steps = min(B8 // 8, 512)
    for n in range(1, max_steps + 1):
        tb = _round_up(_cdiv(B8, n), 8)
        if tb > block_b:
            continue
        pad = n * tb - B
        key = (n == 1, n % 2 != 0, pad, -tb)
        if best is None or key < best[0]:
            best = (key, tb)
    return best[1] if best is not None else block_b


def actor_forward(state, zs, params, *, block_b=1024, out_dtype=jnp.float32,
                  bf16_relu=None, single_buffer_weights=True):
    """Tiled Pallas forward.

    params from init_params (bf16 weights, lane-dense-padded l3).  state/zs
    may be float32 or bfloat16 (bf16 halves input DMA if produced upstream).
    Returns (B, action_dim) in `out_dtype`.
    """
    B, state_dim = state.shape
    zs_dim = zs.shape[1]
    hdim = params["w0"].shape[1]
    action_dim = params["action_dim"]
    out_pad = params["w3"].shape[1]  # multiple of 128

    if bf16_relu is None:
        bf16_relu = _default_bf16_relu()

    weights = (params["w0"], params["b0"],
               params["w1a"], params["w1z"], params["b1"],
               params["w2"], params["b2"],
               params["w3"], params["b3"])
    weight_bytes = sum(int(w.size) * w.dtype.itemsize for w in weights)
    out_itemsize = jnp.dtype(out_dtype).itemsize
    in_itemsize = state.dtype.itemsize

    # Per-row VMEM footprint: double-buffered input tiles + double-buffered
    # output tile + f32 intermediates (h0/a/h1/h2 + bf16 copies, generous 8x).
    bytes_per_row = (2 * (state_dim + zs_dim) * in_itemsize
                     + 2 * out_pad * out_itemsize
                     + 8 * hdim * 4)
    # Keep the working set comfortably inside v7x's 64 MiB physical VMEM.
    vmem_budget = 40 * 1024 * 1024
    max_tb = max(8, ((vmem_budget - 2 * weight_bytes) // bytes_per_row) // 8 * 8)
    block_b = min(block_b, max_tb)

    TB = _choose_tb(B, block_b)
    B_pad = _round_up(B, TB)
    if B_pad != B:
        pad = B_pad - B
        # TODO(synk): for very large ragged batches, mask the last tile
        # in-kernel instead of materializing a padded copy of state/zs.
        state = jnp.pad(state, ((0, pad), (0, 0)))
        zs = jnp.pad(zs, ((0, pad), (0, 0)))

    grid = (B_pad // TB,)

    est_vmem = int(TB * bytes_per_row + 2 * weight_bytes)
    vmem_limit = int(min(64 * 1024 * 1024, max(32 * 1024 * 1024, 2 * est_vmem)))

    def batch_spec(feat):
        return pl.BlockSpec((TB, feat), lambda i: (i, 0))

    out_specs = pl.BlockSpec((TB, out_pad), lambda i: (i, 0))

    # Advisory scheduler hint.
    flops = int(2 * B_pad * (state_dim * hdim + (hdim + zs_dim) * hdim
                             + hdim * hdim + hdim * out_pad))
    transcendentals = int(B_pad * (out_pad + 1))  # tanh + reciprocal per row
    bytes_accessed = int(state.size * in_itemsize + zs.size * in_itemsize
                         + weight_bytes + B_pad * out_pad * out_itemsize)

    kernel = functools.partial(actor_kernel, bf16_relu=bool(bf16_relu))

    def build(weight_pipeline_mode):
        def resident_spec(arr):
            # Constant block index -> VMEM-resident, never re-DMA'd.
            if weight_pipeline_mode is not None:
                return pl.BlockSpec(arr.shape, lambda i: (0, 0),
                                    pipeline_mode=weight_pipeline_mode)
            return pl.BlockSpec(arr.shape, lambda i: (0, 0))

        in_specs = ([batch_spec(state_dim), batch_spec(zs_dim)]
                    + [resident_spec(w) for w in weights])
        return pl.pallas_call(
            kernel,
            out_shape=jax.ShapeDtypeStruct((B_pad, out_pad), out_dtype),
            grid=grid,
            in_specs=in_specs,
            out_specs=out_specs,
            compiler_params=pltpu.CompilerParams(
                dimension_semantics=("parallel",),
                vmem_limit_bytes=vmem_limit),
            cost_estimate=pl.CostEstimate(flops=flops,
                                          transcendentals=transcendentals,
                                          bytes_accessed=bytes_accessed),
        )

    if single_buffer_weights:
        try:
            out = build(pl.Buffered(1))(state, zs, *weights)
        except Exception:
            # Runtime rejected single buffering -> fall back to defaults.
            out = build(None)(state, zs, *weights)
    else:
        out = build(None)(state, zs, *weights)

    return out[:B, :action_dim]


def init_params(key, state_dim, action_dim, zs_dim, hdim):
    """PyTorch-style uniform(-1/sqrt(fan_in), 1/sqrt(fan_in)) init.

    Weights stored transposed (in, out) in bf16; biases (1, out) in f32.
    l1 is split into the a-part (first hdim rows) and zs-part.
    l3 is zero-padded along the output dim to a multiple of 128 (lane-dense
    stores); the pad columns have zero weight and zero bias.
    """
    def linear(key, fan_in, fan_out):
        kw, kb = jax.random.split(key)
        bound = 1.0 / jnp.sqrt(fan_in)
        w = jax.random.uniform(kw, (fan_in, fan_out), jnp.float32, -bound, bound)
        b = jax.random.uniform(kb, (1, fan_out), jnp.float32, -bound, bound)
        return w, b

    k0, k1, k2, k3 = jax.random.split(key, 4)
    w0, b0 = linear(k0, state_dim, hdim)
    w1, b1 = linear(k1, zs_dim + hdim, hdim)   # input is cat([a(hdim), zs(zs_dim)])
    w2, b2 = linear(k2, hdim, hdim)
    w3, b3 = linear(k3, hdim, action_dim)

    out_pad = _round_up(action_dim, 128)
    w3p = jnp.zeros((hdim, out_pad), jnp.float32).at[:, :action_dim].set(w3)
    b3p = jnp.zeros((1, out_pad), jnp.float32).at[:, :action_dim].set(b3)

    bf = lambda x: x.astype(jnp.bfloat16)
    return {
        "action_dim": action_dim,
        "w0": bf(w0), "b0": b0,
        "w1a": bf(w1[:hdim, :]), "w1z": bf(w1[hdim:, :]), "b1": b1,
        "w2": bf(w2), "b2": b2,
        "w3": bf(w3p), "b3": b3p,
    }


def actor_ref(state, zs, params):
    """Plain-JAX reference mirroring the PyTorch forward (f32 math on the
    same bf16-quantized weights)."""
    f32 = lambda x: x.astype(jnp.float32)
    h0 = state @ f32(params["w0"]) + params["b0"]
    a = h0 / jnp.maximum(jnp.mean(jnp.abs(h0), axis=-1, keepdims=True), 1e-8)
    cat = jnp.concatenate([a, zs], axis=1)
    w1 = jnp.concatenate([f32(params["w1a"]), f32(params["w1z"])], axis=0)
    h1 = jax.nn.relu(cat @ w1 + params["b1"])
    h2 = jax.nn.relu(h1 @ f32(params["w2"]) + params["b2"])
    out = jnp.tanh(h2 @ f32(params["w3"]) + params["b3"])
    return out[:, :params["action_dim"]]


if __name__ == "__main__":
    # Small shapes consistent with the module. batch=20 exercises the
    # multi-tile grid AND the non-divisible-batch padding path (the tile
    # chooser picks TB=16 -> 2 grid steps, 12 padded rows).
    batch, state_dim, action_dim = 20, 16, 8
    zs_dim, hdim = 32, 32

    key = jax.random.PRNGKey(0)
    kp, ks, kz = jax.random.split(key, 3)
    params = init_params(kp, state_dim, action_dim, zs_dim, hdim)
    state = jax.random.normal(ks, (batch, state_dim), jnp.float32)
    zs = jax.random.normal(kz, (batch, zs_dim), jnp.float32)

    ref = actor_ref(state, zs, params)

    # Default path: f32 output (matches the PyTorch module's dtype).
    out = jax.block_until_ready(actor_forward(state, zs, params))
    assert out.shape == (batch, action_dim)
    # bf16 matmul inputs -> relaxed tolerance vs f32 reference.
    assert jnp.allclose(out, ref, atol=2e-2, rtol=2e-2), "mismatch vs reference"

    # bf16-output fast path (halves output writeback) also matches.
    out_bf16 = jax.block_until_ready(
        actor_forward(state, zs, params, out_dtype=jnp.bfloat16))
    assert out_bf16.dtype == jnp.bfloat16
    assert jnp.allclose(out_bf16.astype(jnp.float32), ref, atol=3e-2, rtol=3e-2)

    print("KERNEL_OK")
</pallas_src>

<mosaic_0001>
module attributes {stable_mosaic.version = 11 : i64} {
  func.func @actor_kernel(%arg0: i32, %arg1: memref<16x16xf32, #tpu.memory_space<vmem>>, %arg2: memref<16x32xf32, #tpu.memory_space<vmem>>, %arg3: memref<16x32xbf16, #tpu.memory_space<vmem>>, %arg4: memref<1x32xf32, #tpu.memory_space<vmem>>, %arg5: memref<32x32xbf16, #tpu.memory_space<vmem>>, %arg6: memref<32x32xbf16, #tpu.memory_space<vmem>>, %arg7: memref<1x32xf32, #tpu.memory_space<vmem>>, %arg8: memref<32x32xbf16, #tpu.memory_space<vmem>>, %arg9: memref<1x32xf32, #tpu.memory_space<vmem>>, %arg10: memref<32x128xbf16, #tpu.memory_space<vmem>>, %arg11: memref<1x128xf32, #tpu.memory_space<vmem>>, %arg12: memref<16x128xf32, #tpu.memory_space<vmem>>) attributes {dimension_semantics = [#tpu.dimension_semantics<parallel>], iteration_bounds = array<i64: 2>, scalar_prefetch = 0 : i64, scratch_operands = 0 : i64, tpu.core_type = #tpu.core_type<tc>, window_params = [{transform_indices = @transform_0, window_bounds = array<i64: 16, 16>}, {transform_indices = @transform_1, window_bounds = array<i64: 16, 32>}, {pipeline_mode = #tpu.pipeline_mode<synchronous>, transform_indices = @transform_2, window_bounds = array<i64: 16, 32>}, {pipeline_mode = #tpu.pipeline_mode<synchronous>, transform_indices = @transform_3, window_bounds = array<i64: 1, 32>}, {pipeline_mode = #tpu.pipeline_mode<synchronous>, transform_indices = @transform_4, window_bounds = array<i64: 32, 32>}, {pipeline_mode = #tpu.pipeline_mode<synchronous>, transform_indices = @transform_5, window_bounds = array<i64: 32, 32>}, {pipeline_mode = #tpu.pipeline_mode<synchronous>, transform_indices = @transform_6, window_bounds = array<i64: 1, 32>}, {pipeline_mode = #tpu.pipeline_mode<synchronous>, transform_indices = @transform_7, window_bounds = array<i64: 32, 32>}, {pipeline_mode = #tpu.pipeline_mode<synchronous>, transform_indices = @transform_8, window_bounds = array<i64: 1, 32>}, {pipeline_mode = #tpu.pipeline_mode<synchronous>, transform_indices = @transform_9, window_bounds = array<i64: 32, 128>}, {pipeline_mode = #tpu.pipeline_mode<synchronous>, transform_indices = @transform_10, window_bounds = array<i64: 1, 128>}, {transform_indices = @transform_11, window_bounds = array<i64: 16, 128>}]} {
    %c0 = arith.constant 0 : index
    %c0_0 = arith.constant 0 : index
    %0 = vector.load %arg1[%c0, %c0_0] : memref<16x16xf32, #tpu.memory_space<vmem>>, vector<16x16xf32>
    %1 = arith.truncf %0 : vector<16x16xf32> to vector<16x16xbf16>
    %c0_1 = arith.constant 0 : index
    %c0_2 = arith.constant 0 : index
    %2 = vector.load %arg2[%c0_1, %c0_2] : memref<16x32xf32, #tpu.memory_space<vmem>>, vector<16x32xf32>
    %3 = arith.truncf %2 : vector<16x32xf32> to vector<16x32xbf16>
    %c0_3 = arith.constant 0 : index
    %c0_4 = arith.constant 0 : index
    %4 = vector.load %arg3[%c0_3, %c0_4] : memref<16x32xbf16, #tpu.memory_space<vmem>>, vector<16x32xbf16>
    %cst = arith.constant dense<0.000000e+00> : vector<16x32xf32>
    %5 = tpu.matmul %1, %4, %cst {dimension_numbers = #tpu.dot_dimension_numbers<[1], [0], [0], [1], [0, 0, 1, 1], [], []>} : vector<16x16xbf16>, vector<16x32xbf16>, vector<16x32xf32> -> vector<16x32xf32>
    %c0_5 = arith.constant 0 : index
    %c0_6 = arith.constant 0 : index
    %6 = vector.load %arg4[%c0_5, %c0_6] : memref<1x32xf32, #tpu.memory_space<vmem>>, vector<1x32xf32>
    %7 = vector.broadcast %6 : vector<1x32xf32> to vector<16x32xf32>
    %8 = arith.addf %5, %7 : vector<16x32xf32>
    %9 = math.absf %8 : vector<16x32xf32>
    %cst_7 = arith.constant dense<0.000000e+00> : vector<16xf32>
    %10 = vector.multi_reduction <add>, %9, %cst_7 [1] : vector<16x32xf32> to vector<16xf32>
    %11 = vector.shape_cast %10 : vector<16xf32> to vector<16x1xf32>
    %cst_8 = arith.constant 3.200000e+01 : f32
    %12 = vector.broadcast %cst_8 : f32 to vector<16x1xf32>
    %13 = arith.divf %11, %12 : vector<16x1xf32>
    %cst_9 = arith.constant 9.99999993E-9 : f32
    %14 = vector.broadcast %cst_9 : f32 to vector<16x1xf32>
    %15 = arith.maximumf %13, %14 : vector<16x1xf32>
    %16 = tpu.reciprocal %15 : vector<16x1xf32> -> vector<16x1xf32>
    %17 = vector.broadcast %16 : vector<16x1xf32> to vector<16x32xf32>
    %18 = arith.mulf %8, %17 : vector<16x32xf32>
    %19 = arith.truncf %18 : vector<16x32xf32> to vector<16x32xbf16>
    %c0_10 = arith.constant 0 : index
    %c0_11 = arith.constant 0 : index
    %20 = vector.load %arg5[%c0_10, %c0_11] : memref<32x32xbf16, #tpu.memory_space<vmem>>, vector<32x32xbf16>
    %cst_12 = arith.constant dense<0.000000e+00> : vector<16x32xf32>
    %21 = tpu.matmul %19, %20, %cst_12 {dimension_numbers = #tpu.dot_dimension_numbers<[1], [0], [0], [1], [0, 0, 1, 1], [], []>} : vector<16x32xbf16>, vector<32x32xbf16>, vector<16x32xf32> -> vector<16x32xf32>
    %c0_13 = arith.constant 0 : index
    %c0_14 = arith.constant 0 : index
    %22 = vector.load %arg6[%c0_13, %c0_14] : memref<32x32xbf16, #tpu.memory_space<vmem>>, vector<32x32xbf16>
    %cst_15 = arith.constant dense<0.000000e+00> : vector<16x32xf32>
    %23 = tpu.matmul %3, %22, %cst_15 {dimension_numbers = #tpu.dot_dimension_numbers<[1], [0], [0], [1], [0, 0, 1, 1], [], []>} : vector<16x32xbf16>, vector<32x32xbf16>, vector<16x32xf32> -> vector<16x32xf32>
    %24 = arith.addf %21, %23 : vector<16x32xf32>
    %c0_16 = arith.constant 0 : index
    %c0_17 = arith.constant 0 : index
    %25 = vector.load %arg7[%c0_16, %c0_17] : memref<1x32xf32, #tpu.memory_space<vmem>>, vector<1x32xf32>
    %26 = vector.broadcast %25 : vector<1x32xf32> to vector<16x32xf32>
    %27 = arith.addf %24, %26 : vector<16x32xf32>
    %28 = arith.truncf %27 : vector<16x32xf32> to vector<16x32xbf16>
    %cst_18 = arith.constant 0.000000e+00 : bf16
    %29 = vector.broadcast %cst_18 : bf16 to vector<16x32xbf16>
    %30 = arith.maximumf %28, %29 : vector<16x32xbf16>
    %c0_19 = arith.constant 0 : index
    %c0_20 = arith.constant 0 : index
    %31 = vector.load %arg8[%c0_19, %c0_20] : memref<32x32xbf16, #tpu.memory_space<vmem>>, vector<32x32xbf16>
    %cst_21 = arith.constant dense<0.000000e+00> : vector<16x32xf32>
    %32 = tpu.matmul %30, %31, %cst_21 {dimension_numbers = #tpu.dot_dimension_numbers<[1], [0], [0], [1], [0, 0, 1, 1], [], []>} : vector<16x32xbf16>, vector<32x32xbf16>, vector<16x32xf32> -> vector<16x32xf32>
    %c0_22 = arith.constant 0 : index
    %c0_23 = arith.constant 0 : index
    %33 = vector.load %arg9[%c0_22, %c0_23] : memref<1x32xf32, #tpu.memory_space<vmem>>, vector<1x32xf32>
    %34 = vector.broadcast %33 : vector<1x32xf32> to vector<16x32xf32>
    %35 = arith.addf %32, %34 : vector<16x32xf32>
    %36 = arith.truncf %35 : vector<16x32xf32> to vector<16x32xbf16>
    %cst_24 = arith.constant 0.000000e+00 : bf16
    %37 = vector.broadcast %cst_24 : bf16 to vector<16x32xbf16>
    %38 = arith.maximumf %36, %37 : vector<16x32xbf16>
    %c0_25 = arith.constant 0 : index
    %c0_26 = arith.constant 0 : index
    %39 = vector.load %arg10[%c0_25, %c0_26] : memref<32x128xbf16, #tpu.memory_space<vmem>>, vector<32x128xbf16>
    %cst_27 = arith.constant dense<0.000000e+00> : vector<16x128xf32>
    %40 = tpu.matmul %38, %39, %cst_27 {dimension_numbers = #tpu.dot_dimension_numbers<[1], [0], [0], [1], [0, 0, 1, 1], [], []>} : vector<16x32xbf16>, vector<32x128xbf16>, vector<16x128xf32> -> vector<16x128xf32>
    %c0_28 = arith.constant 0 : index
    %c0_29 = arith.constant 0 : index
    %41 = vector.load %arg11[%c0_28, %c0_29] : memref<1x128xf32, #tpu.memory_space<vmem>>, vector<1x128xf32>
    %42 = vector.broadcast %41 : vector<1x128xf32> to vector<16x128xf32>
    %43 = arith.addf %40, %42 : vector<16x128xf32>
    %44 = math.tanh %43 : vector<16x128xf32>
    %c0_30 = arith.constant 0 : index
    %c0_31 = arith.constant 0 : index
    %45 = vector.load %arg12[%c0_30, %c0_31] : memref<16x128xf32, #tpu.memory_space<vmem>>, vector<16x128xf32>
    tpu.vector_store %arg12[%c0_30, %c0_31], %44 {strides = array<i32>} : memref<16x128xf32, #tpu.memory_space<vmem>>, vector<16x128xf32>,
    return
  }
  func.func @transform_0(%arg0: i32) -> (i32, i32) {
    %c0_i32 = arith.constant 0 : i32
    %c0_i32_0 = arith.constant 0 : i32
    return %arg0, %c0_i32 : i32, i32
  }
  func.func @transform_1(%arg0: i32) -> (i32, i32) {
    %c0_i32 = arith.constant 0 : i32
    %c0_i32_0 = arith.constant 0 : i32
    return %arg0, %c0_i32 : i32, i32
  }
  func.func @transform_2(%arg0: i32) -> (i32, i32) {
    %c0_i32 = arith.constant 0 : i32
    %c0_i32_0 = arith.constant 0 : i32
    %c0_i32_1 = arith.constant 0 : i32
    return %c0_i32, %c0_i32_0 : i32, i32
  }
  func.func @transform_3(%arg0: i32) -> (i32, i32) {
    %c0_i32 = arith.constant 0 : i32
    %c0_i32_0 = arith.constant 0 : i32
    %c0_i32_1 = arith.constant 0 : i32
    return %c0_i32, %c0_i32_0 : i32, i32
  }
  func.func @transform_4(%arg0: i32) -> (i32, i32) {
    %c0_i32 = arith.constant 0 : i32
    %c0_i32_0 = arith.constant 0 : i32
    %c0_i32_1 = arith.constant 0 : i32
    return %c0_i32, %c0_i32_0 : i32, i32
  }
  func.func @transform_5(%arg0: i32) -> (i32, i32) {
    %c0_i32 = arith.constant 0 : i32
    %c0_i32_0 = arith.constant 0 : i32
    %c0_i32_1 = arith.constant 0 : i32
    return %c0_i32, %c0_i32_0 : i32, i32
  }
  func.func @transform_6(%arg0: i32) -> (i32, i32) {
    %c0_i32 = arith.constant 0 : i32
    %c0_i32_0 = arith.constant 0 : i32
    %c0_i32_1 = arith.constant 0 : i32
    return %c0_i32, %c0_i32_0 : i32, i32
  }
  func.func @transform_7(%arg0: i32) -> (i32, i32) {
    %c0_i32 = arith.constant 0 : i32
    %c0_i32_0 = arith.constant 0 : i32
    %c0_i32_1 = arith.constant 0 : i32
    return %c0_i32, %c0_i32_0 : i32, i32
  }
  func.func @transform_8(%arg0: i32) -> (i32, i32) {
    %c0_i32 = arith.constant 0 : i32
    %c0_i32_0 = arith.constant 0 : i32
    %c0_i32_1 = arith.constant 0 : i32
    return %c0_i32, %c0_i32_0 : i32, i32
  }
  func.func @transform_9(%arg0: i32) -> (i32, i32) {
    %c0_i32 = arith.constant 0 : i32
    %c0_i32_0 = arith.constant 0 : i32
    %c0_i32_1 = arith.constant 0 : i32
    return %c0_i32, %c0_i32_0 : i32, i32
  }
  func.func @transform_10(%arg0: i32) -> (i32, i32) {
    %c0_i32 = arith.constant 0 : i32
    %c0_i32_0 = arith.constant 0 : i32
    %c0_i32_1 = arith.constant 0 : i32
    return %c0_i32, %c0_i32_0 : i32, i32
  }
  func.func @transform_11(%arg0: i32) -> (i32, i32) {
    %c0_i32 = arith.constant 0 : i32
    %c0_i32_0 = arith.constant 0 : i32
    return %arg0, %c0_i32 : i32, i32
  }
}

module attributes {stable_mosaic.version = 11 : i64} {
  func.func @actor_kernel(%arg0: i32, %arg1: memref<16x16xf32, #tpu.memory_space<vmem>>, %arg2: memref<16x32xf32, #tpu.memory_space<vmem>>, %arg3: memref<16x32xbf16, #tpu.memory_space<vmem>>, %arg4: memref<1x32xf32, #tpu.memory_space<vmem>>, %arg5: memref<32x32xbf16, #tpu.memory_space<vmem>>, %arg6: memref<32x32xbf16, #tpu.memory_space<vmem>>, %arg7: memref<1x32xf32, #tpu.memory_space<vmem>>, %arg8: memref<32x32xbf16, #tpu.memory_space<vmem>>, %arg9: memref<1x32xf32, #tpu.memory_space<vmem>>, %arg10: memref<32x128xbf16, #tpu.memory_space<vmem>>, %arg11: memref<1x128xf32, #tpu.memory_space<vmem>>, %arg12: memref<16x128xf32, #tpu.memory_space<vmem>>) attributes {dimension_semantics = [#tpu.dimension_semantics<parallel>], iteration_bounds = array<i64: 2>, scalar_prefetch = 0 : i64, scratch_operands = 0 : i64, tpu.core_type = #tpu.core_type<tc>, window_params = [{transform_indices = @transform_0, window_bounds = array<i64: 16, 16>}, {transform_indices = @transform_1, window_bounds = array<i64: 16, 32>}, {pipeline_mode = #tpu.pipeline_mode<synchronous>, transform_indices = @transform_2, window_bounds = array<i64: 16, 32>}, {pipeline_mode = #tpu.pipeline_mode<synchronous>, transform_indices = @transform_3, window_bounds = array<i64: 1, 32>}, {pipeline_mode = #tpu.pipeline_mode<synchronous>, transform_indices = @transform_4, window_bounds = array<i64: 32, 32>}, {pipeline_mode = #tpu.pipeline_mode<synchronous>, transform_indices = @transform_5, window_bounds = array<i64: 32, 32>}, {pipeline_mode = #tpu.pipeline_mode<synchronous>, transform_indices = @transform_6, window_bounds = array<i64: 1, 32>}, {pipeline_mode = #tpu.pipeline_mode<synchronous>, transform_indices = @transform_7, window_bounds = array<i64: 32, 32>}, {pipeline_mode = #tpu.pipeline_mode<synchronous>, transform_indices = @transform_8, window_bounds = array<i64: 1, 32>}, {pipeline_mode = #tpu.pipeline_mode<synchronous>, transform_indices = @transform_9, window_bounds = array<i64: 32, 128>}, {pipeline_mode = #tpu.pipeline_mode<synchronous>, transform_indices = @transform_10, window_bounds = array<i64: 1, 128>}, {transform_indices = @transform_11, window_bounds = array<i64: 16, 128>}]} {
    %c0 = arith.constant 0 : index
    %c0_0 = arith.constant 0 : index
    %0 = vector.load %arg1[%c0, %c0_0] : memref<16x16xf32, #tpu.memory_space<vmem>>, vector<16x16xf32>
    %1 = arith.truncf %0 : vector<16x16xf32> to vector<16x16xbf16>
    %c0_1 = arith.constant 0 : index
    %c0_2 = arith.constant 0 : index
    %2 = vector.load %arg2[%c0_1, %c0_2] : memref<16x32xf32, #tpu.memory_space<vmem>>, vector<16x32xf32>
    %3 = arith.truncf %2 : vector<16x32xf32> to vector<16x32xbf16>
    %c0_3 = arith.constant 0 : index
    %c0_4 = arith.constant 0 : index
    %4 = vector.load %arg3[%c0_3, %c0_4] : memref<16x32xbf16, #tpu.memory_space<vmem>>, vector<16x32xbf16>
    %cst = arith.constant dense<0.000000e+00> : vector<16x32xf32>
    %5 = tpu.matmul %1, %4, %cst {dimension_numbers = #tpu.dot_dimension_numbers<[1], [0], [0], [1], [0, 0, 1, 1], [], []>} : vector<16x16xbf16>, vector<16x32xbf16>, vector<16x32xf32> -> vector<16x32xf32>
    %c0_5 = arith.constant 0 : index
    %c0_6 = arith.constant 0 : index
    %6 = vector.load %arg4[%c0_5, %c0_6] : memref<1x32xf32, #tpu.memory_space<vmem>>, vector<1x32xf32>
    %7 = vector.broadcast %6 : vector<1x32xf32> to vector<16x32xf32>
    %8 = arith.addf %5, %7 : vector<16x32xf32>
    %9 = math.absf %8 : vector<16x32xf32>
    %cst_7 = arith.constant dense<0.000000e+00> : vector<16xf32>
    %10 = vector.multi_reduction <add>, %9, %cst_7 [1] : vector<16x32xf32> to vector<16xf32>
    %11 = vector.shape_cast %10 : vector<16xf32> to vector<16x1xf32>
    %cst_8 = arith.constant 3.200000e+01 : f32
    %12 = vector.broadcast %cst_8 : f32 to vector<16x1xf32>
    %13 = arith.divf %11, %12 : vector<16x1xf32>
    %cst_9 = arith.constant 9.99999993E-9 : f32
    %14 = vector.broadcast %cst_9 : f32 to vector<16x1xf32>
    %15 = arith.maximumf %13, %14 : vector<16x1xf32>
    %16 = tpu.reciprocal %15 : vector<16x1xf32> -> vector<16x1xf32>
    %17 = vector.broadcast %16 : vector<16x1xf32> to vector<16x32xf32>
    %18 = arith.mulf %8, %17 : vector<16x32xf32>
    %19 = arith.truncf %18 : vector<16x32xf32> to vector<16x32xbf16>
    %c0_10 = arith.constant 0 : index
    %c0_11 = arith.constant 0 : index
    %20 = vector.load %arg5[%c0_10, %c0_11] : memref<32x32xbf16, #tpu.memory_space<vmem>>, vector<32x32xbf16>
    %cst_12 = arith.constant dense<0.000000e+00> : vector<16x32xf32>
    %21 = tpu.matmul %19, %20, %cst_12 {dimension_numbers = #tpu.dot_dimension_numbers<[1], [0], [0], [1], [0, 0, 1, 1], [], []>} : vector<16x32xbf16>, vector<32x32xbf16>, vector<16x32xf32> -> vector<16x32xf32>
    %c0_13 = arith.constant 0 : index
    %c0_14 = arith.constant 0 : index
    %22 = vector.load %arg6[%c0_13, %c0_14] : memref<32x32xbf16, #tpu.memory_space<vmem>>, vector<32x32xbf16>
    %cst_15 = arith.constant dense<0.000000e+00> : vector<16x32xf32>
    %23 = tpu.matmul %3, %22, %cst_15 {dimension_numbers = #tpu.dot_dimension_numbers<[1], [0], [0], [1], [0, 0, 1, 1], [], []>} : vector<16x32xbf16>, vector<32x32xbf16>, vector<16x32xf32> -> vector<16x32xf32>
    %24 = arith.addf %21, %23 : vector<16x32xf32>
    %c0_16 = arith.constant 0 : index
    %c0_17 = arith.constant 0 : index
    %25 = vector.load %arg7[%c0_16, %c0_17] : memref<1x32xf32, #tpu.memory_space<vmem>>, vector<1x32xf32>
    %26 = vector.broadcast %25 : vector<1x32xf32> to vector<16x32xf32>
    %27 = arith.addf %24, %26 : vector<16x32xf32>
    %28 = arith.truncf %27 : vector<16x32xf32> to vector<16x32xbf16>
    %cst_18 = arith.constant 0.000000e+00 : bf16
    %29 = vector.broadcast %cst_18 : bf16 to vector<16x32xbf16>
    %30 = arith.maximumf %28, %29 : vector<16x32xbf16>
    %c0_19 = arith.constant 0 : index
    %c0_20 = arith.constant 0 : index
    %31 = vector.load %arg8[%c0_19, %c0_20] : memref<32x32xbf16, #tpu.memory_space<vmem>>, vector<32x32xbf16>
    %cst_21 = arith.constant dense<0.000000e+00> : vector<16x32xf32>
    %32 = tpu.matmul %30, %31, %cst_21 {dimension_numbers = #tpu.dot_dimension_numbers<[1], [0], [0], [1], [0, 0, 1, 1], [], []>} : vector<16x32xbf16>, vector<32x32xbf16>, vector<16x32xf32> -> vector<16x32xf32>
    %c0_22 = arith.constant 0 : index
    %c0_23 = arith.constant 0 : index
    %33 = vector.load %arg9[%c0_22, %c0_23] : memref<1x32xf32, #tpu.memory_space<vmem>>, vector<1x32xf32>
    %34 = vector.broadcast %33 : vector<1x32xf32> to vector<16x32xf32>
    %35 = arith.addf %32, %34 : vector<16x32xf32>
    %36 = arith.truncf %35 : vector<16x32xf32> to vector<16x32xbf16>
    %cst_24 = arith.constant 0.000000e+00 : bf16
    %37 = vector.broadcast %cst_24 : bf16 to vector<16x32xbf16>
    %38 = arith.maximumf %36, %37 : vector<16x32xbf16>
    %c0_25 = arith.constant 0 : index
    %c0_26 = arith.constant 0 : index
    %39 = vector.load %arg10[%c0_25, %c0_26] : memref<32x128xbf16, #tpu.memory_space<vmem>>, vector<32x128xbf16>
    %cst_27 = arith.constant dense<0.000000e+00> : vector<16x128xf32>
    %40 = tpu.matmul %38, %39, %cst_27 {dimension_numbers = #tpu.dot_dimension_numbers<[1], [0], [0], [1], [0, 0, 1, 1], [], []>} : vector<16x32xbf16>, vector<32x128xbf16>, vector<16x128xf32> -> vector<16x128xf32>
    %c0_28 = arith.constant 0 : index
    %c0_29 = arith.constant 0 : index
    %41 = vector.load %arg11[%c0_28, %c0_29] : memref<1x128xf32, #tpu.memory_space<vmem>>, vector<1x128xf32>
    %42 = vector.broadcast %41 : vector<1x128xf32> to vector<16x128xf32>
    %43 = arith.addf %40, %42 : vector<16x128xf32>
    %44 = math.tanh %43 : vector<16x128xf32>
    %c0_30 = arith.constant 0 : index
    %c0_31 = arith.constant 0 : index
    %45 = vector.load %arg12[%c0_30, %c0_31] : memref<16x128xf32, #tpu.memory_space<vmem>>, vector<16x128xf32>
    tpu.vector_store %arg12[%c0_30, %c0_31], %44 {strides = array<i32>} : memref<16x128xf32, #tpu.memory_space<vmem>>, vector<16x128xf32>,
    return
  }
  func.func @transform_0(%arg0: i32) -> (i32, i32) {
    %c0_i32 = arith.constant 0 : i32
    %c0_i32_0 = arith.constant 0 : i32
    return %arg0, %c0_i32 : i32, i32
  }
  func.func @transform_1(%arg0: i32) -> (i32, i32) {
    %c0_i32 = arith.constant 0 : i32
    %c0_i32_0 = arith.constant 0 : i32
    return %arg0, %c0_i32 : i32, i32
  }
  func.func @transform_2(%arg0: i32) -> (i32, i32) {
    %c0_i32 = arith.constant 0 : i32
    %c0_i32_0 = arith.constant 0 : i32
    %c0_i32_1 = arith.constant 0 : i32
    return %c0_i32, %c0_i32_0 : i32, i32
  }
  func.func @transform_3(%arg0: i32) -> (i32, i32) {
    %c0_i32 = arith.constant 0 : i32
    %c0_i32_0 = arith.constant 0 : i32
    %c0_i32_1 = arith.constant 0 : i32
    return %c0_i32, %c0_i32_0 : i32, i32
  }
  func.func @transform_4(%arg0: i32) -> (i32, i32) {
    %c0_i32 = arith.constant 0 : i32
    %c0_i32_0 = arith.constant 0 : i32
    %c0_i32_1 = arith.constant 0 : i32
    return %c0_i32, %c0_i32_0 : i32, i32
  }
  func.func @transform_5(%arg0: i32) -> (i32, i32) {
    %c0_i32 = arith.constant 0 : i32
    %c0_i32_0 = arith.constant 0 : i32
    %c0_i32_1 = arith.constant 0 : i32
    return %c0_i32, %c0_i32_0 : i32, i32
  }
  func.func @transform_6(%arg0: i32) -> (i32, i32) {
    %c0_i32 = arith.constant 0 : i32
    %c0_i32_0 = arith.constant 0 : i32
    %c0_i32_1 = arith.constant 0 : i32
    return %c0_i32, %c0_i32_0 : i32, i32
  }
  func.func @transform_7(%arg0: i32) -> (i32, i32) {
    %c0_i32 = arith.constant 0 : i32
    %c0_i32_0 = arith.constant 0 : i32
    %c0_i32_1 = arith.constant 0 : i32
    return %c0_i32, %c0_i32_0 : i32, i32
  }
  func.func @transform_8(%arg0: i32) -> (i32, i32) {
    %c0_i32 = arith.constant 0 : i32
    %c0_i32_0 = arith.constant 0 : i32
    %c0_i32_1 = arith.constant 0 : i32
    return %c0_i32, %c0_i32_0 : i32, i32
  }
  func.func @transform_9(%arg0: i32) -> (i32, i32) {
    %c0_i32 = arith.constant 0 : i32
    %c0_i32_0 = arith.constant 0 : i32
    %c0_i32_1 = arith.constant 0 : i32
    return %c0_i32, %c0_i32_0 : i32, i32
  }
  func.func @transform_10(%arg0: i32) -> (i32, i32) {
    %c0_i32 = arith.constant 0 : i32
    %c0_i32_0 = arith.constant 0 : i32
    %c0_i32_1 = arith.constant 0 : i32
    return %c0_i32, %c0_i32_0 : i32, i32
  }
  func.func @transform_11(%arg0: i32) -> (i32, i32) {
    %c0_i32 = arith.constant 0 : i32
    %c0_i32_0 = arith.constant 0 : i32
    return %arg0, %c0_i32 : i32, i32
  }
}

</mosaic_0001>

<llo_original>
// kernel: tpu_custom_call.1
$region0: #{tpu_custom_call.1}
  #allocation0 [shape = 'u32[]', space=smem, size = 0x4, offset = 0x4, fixed_abs, tag = 'smem constant byte address 0x4 - core index']
  #allocation1 [shape = 'u32[144,128]{1,0:T(1,128)}', space=vmem, size = 0x12000, scoped, tag = 'internal scratch']
  %s0 = inlined_call_operand.vmem [shape: f32[32,16], index: 0, kind: input, shape index: {}]
  %s1 = inlined_call_operand.vmem [shape: f32[32,32], index: 1, kind: input, shape index: {}]
  %s2 = inlined_call_operand.hbm [shape: bf16[16,32], index: 2, kind: input, shape index: {}]
  %s3 = inlined_call_operand.vmem [shape: f32[1,32], index: 3, kind: input, shape index: {}]
  %s4 = inlined_call_operand.vmem [shape: bf16[32,32], index: 4, kind: input, shape index: {}]
  %s5 = inlined_call_operand.vmem [shape: bf16[32,32], index: 5, kind: input, shape index: {}]
  %s6 = inlined_call_operand.vmem [shape: f32[1,32], index: 6, kind: input, shape index: {}]
  %s7 = inlined_call_operand.hbm [shape: bf16[32,32], index: 7, kind: input, shape index: {}]
  %s8 = inlined_call_operand.hbm [shape: f32[1,32], index: 8, kind: input, shape index: {}]
  %s9 = inlined_call_operand.vmem [shape: bf16[32,128], index: 9, kind: input, shape index: {}]
  %s10 = inlined_call_operand.vmem [shape: f32[1,128], index: 10, kind: input, shape index: {}]
  %s11 = inlined_call_operand.hbm [shape: f32[32,128], index: 11, kind: output, shape index: {}]
  %s12 = sld [smem:[#allocation0]]
  $region89: #{tpu_custom_call.1} parent=0
    _
  %s14 = ssub.s32 1, %s12
  %s15 = scalar_select 0, %s14, %s12
  $region1: #{tpu_custom_call.1} parent=0
    #allocation2 [shape = 'u8[4096]{0}', space=vmem, size = 0x1000, scoped, tag = 'input window, operand 2, single buffered']
    #allocation3 [shape = 's32[2]{0}', space=sflag, size = 0x8, scoped, tag = 'scoped memory for tpu_custom_call.1']
    #allocation4 [shape = 's32[2]{0}', space=sflag, size = 0x8, scoped, tag = 'scoped memory for tpu_custom_call.1']
    #allocation5 [shape = 'u8[8192]{0}', space=vmem, size = 0x2000, scoped, tag = 'input window, operand 7, single buffered']
    #allocation6 [shape = 's32[1]{0}', space=sflag, size = 0x4, scoped, tag = 'scoped memory for tpu_custom_call.1']
    #allocation7 [shape = 'u8[512]{0}', space=vmem, size = 0x400, scoped, tag = 'input window, operand 8, single buffered']
    #allocation8 [shape = 'u8[16384]{0}', space=vmem, size = 0x4000, scoped, tag = 'output window, operand 0']
    %16 = vsyncpa [#allocation3], 0
    %17 = vsyncpa [#allocation6], 0
    %18 = vsyncpa [#allocation4], 0
    %s19 = scalar_lea.sflag [#allocation4], 1
    %20 = vsyncpa %s19, 0
    loop: start=0, step=1, limit=4
    $region2: #{tpu_custom_call.1} parent=1 // loop_pre_header
      _
    $region3: #{tpu_custom_call.1} parent=1 // loop_header
      %s22 = sphi 0, %s26
      %p23 = scmp.ge.s32.totalorder %s22, 4
      %s32 = sphi 0, %s34
      %s35 = sphi 0, %s32
      %s36 = sphi 0, %s35
      %s52 = sphi 0, %s36
      %s58 = sphi 0, %s60
      %s61 = sphi 0, %s58
      %s62 = sphi 0, %s61
      %s78 = sphi 0, %s62
      %s82 = sphi 0, %s82
      %s84 = sphi 0, %s82
      %s85 = sphi 0, %s84
      %s99 = sphi 0, %s85
      %s103 = sphi 0, %s103
      %s105 = sphi 0, %s103
      %s106 = sphi 0, %s105
      %s120 = sphi 0, %s106
      %s124 = sphi 0, %s124
      %s126 = sphi 0, %s124
      %s127 = sphi 0, %s126
      %s141 = sphi 0, %s127
      %s145 = sphi 0, %s145
      %s147 = sphi 0, %s145
      %s148 = sphi 0, %s147
      %s162 = sphi 0, %s148
      %s166 = sphi 0, %s166
      %s168 = sphi 0, %s166
      %s169 = sphi 0, %s168
      %s183 = sphi 0, %s169
      %s187 = sphi 0, %s187
      %s189 = sphi 0, %s187
      %s190 = sphi 0, %s189
      %s204 = sphi 0, %s190
      %s208 = sphi 0, %s208
      %s210 = sphi 0, %s208
      %s211 = sphi 0, %s210
      %s225 = sphi 0, %s211
      %s229 = sphi 0, %s229
      %s231 = sphi 0, %s229
      %s232 = sphi 0, %s231
      %s246 = sphi 0, %s232
      %s250 = sphi 0, %s250
      %s252 = sphi 0, %s250
      %s253 = sphi 0, %s252
      %s267 = sphi 0, %s253
      %s273 = sphi 0, %s275
      %s276 = sphi 0, %s273
      %s277 = sphi 0, %s276
      %s293 = sphi 0, %s277
    $region4: #{tpu_custom_call.1} parent=1 // loop_header_branch
      %25 = sbr.rel (%p23) target = $region8
    $region5: #{tpu_custom_call.1} parent=1 // loop_body
      %s27 = ssub.s32 %s22, 1
      %s28 = ssub.s32 %s22, 2
      %s29 = sadd.s32 %s22, 1
      %s30 = ssub.s32 %s22, %s29
      %p31 = scmp.eq.s32.totalorder %s30, 0
      %s33 = sadd.s32 %s32, 1
      %s34 = scalar_select %p31, %s32, %s33
      %p37 = pneg %p31
      %p38 = scmp.eq.s32.totalorder %s22, 1
      %p39 = por %p37, %p38
      %p40 = scmp.ne.s32.totalorder %s32, %s35
      %p41 = scmp.eq.s32.totalorder %s22, 0
      %p42 = por %p40, %p41
      %p43 = scmp.ne.s32.totalorder %s32, %s35
      %p44 = scmp.eq.s32.totalorder %s27, 1
      %p45 = por %p43, %p44
      %p46 = scmp.ne.s32.totalorder %s35, %s36
      %p47 = scmp.eq.s32.totalorder %s27, 0
      %p48 = por %p46, %p47
      %p49 = scmp.ne.s32.totalorder %s35, %s36
      %p50 = scmp.eq.s32.totalorder %s28, 1
      %p51 = por %p49, %p50
      %p53 = scmp.ne.s32.totalorder %s36, %s52
      %p54 = scmp.eq.s32.totalorder %s28, 0
      %p55 = por %p53, %p54
      %s56 = ssub.s32 %s22, %s29
      %p57 = scmp.eq.s32.totalorder %s56, 0
      %s59 = sadd.s32 %s58, 1
      %s60 = scalar_select %p57, %s58, %s59
      %p63 = pneg %p57
      %p64 = scmp.eq.s32.totalorder %s22, 1
      %p65 = por %p63, %p64
      %p66 = scmp.ne.s32.totalorder %s58, %s61
      %p67 = scmp.eq.s32.totalorder %s22, 0
      %p68 = por %p66, %p67
      %p69 = scmp.ne.s32.totalorder %s58, %s61
      %p70 = scmp.eq.s32.totalorder %s27, 1
      %p71 = por %p69, %p70
      %p72 = scmp.ne.s32.totalorder %s61, %s62
      %p73 = scmp.eq.s32.totalorder %s27, 0
      %p74 = por %p72, %p73
      %p75 = scmp.ne.s32.totalorder %s61, %s62
      %p76 = scmp.eq.s32.totalorder %s28, 1
      %p77 = por %p75, %p76
      %p79 = scmp.ne.s32.totalorder %s62, %s78
      %p80 = scmp.eq.s32.totalorder %s28, 0
      %p81 = por %p79, %p80
      %s83 = sadd.s32 %s82, 1
      %p86 = scmp.eq.s32.totalorder %s22, 1
      %p87 = scmp.ne.s32.totalorder %s82, %s84
      %p88 = scmp.eq.s32.totalorder %s22, 0
      %p89 = por %p87, %p88
      %p90 = scmp.ne.s32.totalorder %s82, %s84
      %p91 = scmp.eq.s32.totalorder %s27, 1
      %p92 = por %p90, %p91
      %p93 = scmp.ne.s32.totalorder %s84, %s85
      %p94 = scmp.eq.s32.totalorder %s27, 0
      %p95 = por %p93, %p94
      %p96 = scmp.ne.s32.totalorder %s84, %s85
      %p97 = scmp.eq.s32.totalorder %s28, 1
      %p98 = por %p96, %p97
      %p100 = scmp.ne.s32.totalorder %s85, %s99
      %p101 = scmp.eq.s32.totalorder %s28, 0
      %p102 = por %p100, %p101
      %s104 = sadd.s32 %s103, 1
      %p107 = scmp.eq.s32.totalorder %s22, 1
      %p108 = scmp.ne.s32.totalorder %s103, %s105
      %p109 = scmp.eq.s32.totalorder %s22, 0
      %p110 = por %p108, %p109
      %p111 = scmp.ne.s32.totalorder %s103, %s105
      %p112 = scmp.eq.s32.totalorder %s27, 1
      %p113 = por %p111, %p112
      %p114 = scmp.ne.s32.totalorder %s105, %s106
      %p115 = scmp.eq.s32.totalorder %s27, 0
      %p116 = por %p114, %p115
      %p117 = scmp.ne.s32.totalorder %s105, %s106
      %p118 = scmp.eq.s32.totalorder %s28, 1
      %p119 = por %p117, %p118
      %p121 = scmp.ne.s32.totalorder %s106, %s120
      %p122 = scmp.eq.s32.totalorder %s28, 0
      %p123 = por %p121, %p122
      %s125 = sadd.s32 %s124, 1
      %p128 = scmp.eq.s32.totalorder %s22, 1
      %p129 = scmp.ne.s32.totalorder %s124, %s126
      %p130 = scmp.eq.s32.totalorder %s22, 0
      %p131 = por %p129, %p130
      %p132 = scmp.ne.s32.totalorder %s124, %s126
      %p133 = scmp.eq.s32.totalorder %s27, 1
      %p134 = por %p132, %p133
      %p135 = scmp.ne.s32.totalorder %s126, %s127
      %p136 = scmp.eq.s32.totalorder %s27, 0
      %p137 = por %p135, %p136
      %p138 = scmp.ne.s32.totalorder %s126, %s127
      %p139 = scmp.eq.s32.totalorder %s28, 1
      %p140 = por %p138, %p139
      %p142 = scmp.ne.s32.totalorder %s127, %s141
      %p143 = scmp.eq.s32.totalorder %s28, 0
      %p144 = por %p142, %p143
      %s146 = sadd.s32 %s145, 1
      %p149 = scmp.eq.s32.totalorder %s22, 1
      %p150 = scmp.ne.s32.totalorder %s145, %s147
      %p151 = scmp.eq.s32.totalorder %s22, 0
      %p152 = por %p150, %p151
      %p153 = scmp.ne.s32.totalorder %s145, %s147
      %p154 = scmp.eq.s32.totalorder %s27, 1
      %p155 = por %p153, %p154
      %p156 = scmp.ne.s32.totalorder %s147, %s148
      %p157 = scmp.eq.s32.totalorder %s27, 0
      %p158 = por %p156, %p157
      %p159 = scmp.ne.s32.totalorder %s147, %s148
      %p160 = scmp.eq.s32.totalorder %s28, 1
      %p161 = por %p159, %p160
      %p163 = scmp.ne.s32.totalorder %s148, %s162
      %p164 = scmp.eq.s32.totalorder %s28, 0
      %p165 = por %p163, %p164
      %s167 = sadd.s32 %s166, 1
      %p170 = scmp.eq.s32.totalorder %s22, 1
      %p171 = scmp.ne.s32.totalorder %s166, %s168
      %p172 = scmp.eq.s32.totalorder %s22, 0
      %p173 = por %p171, %p172
      %p174 = scmp.ne.s32.totalorder %s166, %s168
      %p175 = scmp.eq.s32.totalorder %s27, 1
      %p176 = por %p174, %p175
      %p177 = scmp.ne.s32.totalorder %s168, %s169
      %p178 = scmp.eq.s32.totalorder %s27, 0
      %p179 = por %p177, %p178
      %p180 = scmp.ne.s32.totalorder %s168, %s169
      %p181 = scmp.eq.s32.totalorder %s28, 1
      %p182 = por %p180, %p181
      %p184 = scmp.ne.s32.totalorder %s169, %s183
      %p185 = scmp.eq.s32.totalorder %s28, 0
      %p186 = por %p184, %p185
      %s188 = sadd.s32 %s187, 1
      %p191 = scmp.eq.s32.totalorder %s22, 1
      %p192 = scmp.ne.s32.totalorder %s187, %s189
      %p193 = scmp.eq.s32.totalorder %s22, 0
      %p194 = por %p192, %p193
      %p195 = scmp.ne.s32.totalorder %s187, %s189
      %p196 = scmp.eq.s32.totalorder %s27, 1
      %p197 = por %p195, %p196
      %p198 = scmp.ne.s32.totalorder %s189, %s190
      %p199 = scmp.eq.s32.totalorder %s27, 0
      %p200 = por %p198, %p199
      %p201 = scmp.ne.s32.totalorder %s189, %s190
      %p202 = scmp.eq.s32.totalorder %s28, 1
      %p203 = por %p201, %p202
      %p205 = scmp.ne.s32.totalorder %s190, %s204
      %p206 = scmp.eq.s32.totalorder %s28, 0
      %p207 = por %p205, %p206
      %s209 = sadd.s32 %s208, 1
      %p212 = scmp.eq.s32.totalorder %s22, 1
      %p213 = scmp.ne.s32.totalorder %s208, %s210
      %p214 = scmp.eq.s32.totalorder %s22, 0
      %p215 = por %p213, %p214
      %p216 = scmp.ne.s32.totalorder %s208, %s210
      %p217 = scmp.eq.s32.totalorder %s27, 1
      %p218 = por %p216, %p217
      %p219 = scmp.ne.s32.totalorder %s210, %s211
      %p220 = scmp.eq.s32.totalorder %s27, 0
      %p221 = por %p219, %p220
      %p222 = scmp.ne.s32.totalorder %s210, %s211
      %p223 = scmp.eq.s32.totalorder %s28, 1
      %p224 = por %p222, %p223
      %p226 = scmp.ne.s32.totalorder %s211, %s225
      %p227 = scmp.eq.s32.totalorder %s28, 0
      %p228 = por %p226, %p227
      %s230 = sadd.s32 %s229, 1
      %p233 = scmp.eq.s32.totalorder %s22, 1
      %p234 = scmp.ne.s32.totalorder %s229, %s231
      %p235 = scmp.eq.s32.totalorder %s22, 0
      %p236 = por %p234, %p235
      %p237 = scmp.ne.s32.totalorder %s229, %s231
      %p238 = scmp.eq.s32.totalorder %s27, 1
      %p239 = por %p237, %p238
      %p240 = scmp.ne.s32.totalorder %s231, %s232
      %p241 = scmp.eq.s32.totalorder %s27, 0
      %p242 = por %p240, %p241
      %p243 = scmp.ne.s32.totalorder %s231, %s232
      %p244 = scmp.eq.s32.totalorder %s28, 1
      %p245 = por %p243, %p244
      %p247 = scmp.ne.s32.totalorder %s232, %s246
      %p248 = scmp.eq.s32.totalorder %s28, 0
      %p249 = por %p247, %p248
      %s251 = sadd.s32 %s250, 1
      %p254 = scmp.eq.s32.totalorder %s22, 1
      %p255 = scmp.ne.s32.totalorder %s250, %s252
      %p256 = scmp.eq.s32.totalorder %s22, 0
      %p257 = por %p255, %p256
      %p258 = scmp.ne.s32.totalorder %s250, %s252
      %p259 = scmp.eq.s32.totalorder %s27, 1
      %p260 = por %p258, %p259
      %p261 = scmp.ne.s32.totalorder %s252, %s253
      %p262 = scmp.eq.s32.totalorder %s27, 0
      %p263 = por %p261, %p262
      %p264 = scmp.ne.s32.totalorder %s252, %s253
      %p265 = scmp.eq.s32.totalorder %s28, 1
      %p266 = por %p264, %p265
      %p268 = scmp.ne.s32.totalorder %s253, %s267
      %p269 = scmp.eq.s32.totalorder %s28, 0
      %p270 = por %p268, %p269
      %s271 = ssub.s32 %s22, %s29
      %p272 = scmp.eq.s32.totalorder %s271, 0
      %s274 = sadd.s32 %s273, 1
      %s275 = scalar_select %p272, %s273, %s274
      %p278 = pneg %p272
      %p279 = scmp.eq.s32.totalorder %s22, 1
      %p280 = por %p278, %p279
      %p281 = scmp.ne.s32.totalorder %s273, %s276
      %p282 = scmp.eq.s32.totalorder %s22, 0
      %p283 = por %p281, %p282
      %p284 = scmp.ne.s32.totalorder %s273, %s276
      %p285 = scmp.eq.s32.totalorder %s27, 1
      %p286 = por %p284, %p285
      %p287 = scmp.ne.s32.totalorder %s276, %s277
      %p288 = scmp.eq.s32.totalorder %s27, 0
      %p289 = por %p287, %p288
      %p290 = scmp.ne.s32.totalorder %s276, %s277
      %p291 = scmp.eq.s32.totalorder %s28, 1
      %p292 = por %p290, %p291
      %p294 = scmp.ne.s32.totalorder %s277, %s293
      %p295 = scmp.eq.s32.totalorder %s28, 0
      %p296 = por %p294, %p295
      %p297 = scmp.le.s32.totalorder 1, %s22
      %p298 = scmp.lt.s32.totalorder %s22, 3
      %p299 = pnand %p297, %p298
      %p300 = pneg %p299
      // Predicated region
      $region9: #{tpu_custom_call.1} parent=5 // pred_check
        _
      $region10: #{tpu_custom_call.1} parent=5 // pred_check_branch
        %302 = sbr.rel (%p299) target = $region12
      $region11: #{tpu_custom_call.1} parent=5 // pred_region
        %s303 = ssub.s32 %s22, 1
        // Predicated region
        $region13: #{tpu_custom_call.1} parent=11 // pred_check
          %p304 = pneg %p95
        $region14: #{tpu_custom_call.1} parent=11 // pred_check_branch
          %306 = sbr.rel (%p304) target = $region16
        $region15: #{tpu_custom_call.1} parent=11 // pred_region
          %s308 = ssub.s32 128, 128
          %309 = vsyncadd [#allocation3], %s308
          %s310 = sshll.u32 [#allocation2], 4
          %s311 = int_to_ptr.vmem [resolvable:$true] %s310
          %316 = dma.hbm_to_vmem [thread:$0]  %s2, 128, %s311, [#allocation3], 64, 64, 4
        $region16: #{tpu_custom_call.1} parent=11 // pred_fallthru
          _
        // Predicated region
        $region17: #{tpu_custom_call.1} parent=11 // pred_check
          %p317 = pneg %p116
        $region18: #{tpu_custom_call.1} parent=11 // pred_check_branch
          %319 = sbr.rel (%p317) target = $region20
        $region19: #{tpu_custom_call.1} parent=11 // pred_region
          _
        $region20: #{tpu_custom_call.1} parent=11 // pred_fallthru
          _
        // Predicated region
        $region21: #{tpu_custom_call.1} parent=11 // pred_check
          %p320 = pneg %p137
        $region22: #{tpu_custom_call.1} parent=11 // pred_check_branch
          %322 = sbr.rel (%p320) target = $region24
        $region23: #{tpu_custom_call.1} parent=11 // pred_region
          _
        $region24: #{tpu_custom_call.1} parent=11 // pred_fallthru
          _
        // Predicated region
        $region25: #{tpu_custom_call.1} parent=11 // pred_check
          %p323 = pneg %p158
        $region26: #{tpu_custom_call.1} parent=11 // pred_check_branch
          %325 = sbr.rel (%p323) target = $region28
        $region27: #{tpu_custom_call.1} parent=11 // pred_region
          _
        $region28: #{tpu_custom_call.1} parent=11 // pred_fallthru
          _
        // Predicated region
        $region29: #{tpu_custom_call.1} parent=11 // pred_check
          %p326 = pneg %p179
        $region30: #{tpu_custom_call.1} parent=11 // pred_check_branch
          %328 = sbr.rel (%p326) target = $region32
        $region31: #{tpu_custom_call.1} parent=11 // pred_region
          _
        $region32: #{tpu_custom_call.1} parent=11 // pred_fallthru
          _
        // Predicated region
        $region33: #{tpu_custom_call.1} parent=11 // pred_check
          %p329 = pneg %p200
        $region34: #{tpu_custom_call.1} parent=11 // pred_check_branch
          %331 = sbr.rel (%p329) target = $region36
        $region35: #{tpu_custom_call.1} parent=11 // pred_region
          %s333 = ssub.s32 256, 256
          %334 = vsyncadd [#allocation6], %s333
          %s335 = sshll.u32 [#allocation5], 4
          %s336 = int_to_ptr.vmem [resolvable:$true] %s335
          %341 = dma.hbm_to_vmem [thread:$0]  %s7, 256, %s336, [#allocation6], 64, 64, 4
        $region36: #{tpu_custom_call.1} parent=11 // pred_fallthru
          _
        // Predicated region
        $region37: #{tpu_custom_call.1} parent=11 // pred_check
          %p342 = pneg %p221
        $region38: #{tpu_custom_call.1} parent=11 // pred_check_branch
          %344 = sbr.rel (%p342) target = $region40
        $region39: #{tpu_custom_call.1} parent=11 // pred_region
          %s346 = ssub.s32 16, 16
          %347 = vsyncadd [#allocation6], %s346
          %s349 = sshll.u32 [#allocation7], 4
          %s350 = int_to_ptr.vmem [resolvable:$true] %s349
          %352 = dma.hbm_to_vmem [thread:$0]  %s8, 16, %s350, [#allocation6]
        $region40: #{tpu_custom_call.1} parent=11 // pred_fallthru
          _
        // Predicated region
        $region41: #{tpu_custom_call.1} parent=11 // pred_check
          %p353 = pneg %p242
        $region42: #{tpu_custom_call.1} parent=11 // pred_check_branch
          %355 = sbr.rel (%p353) target = $region44
        $region43: #{tpu_custom_call.1} parent=11 // pred_region
          _
        $region44: #{tpu_custom_call.1} parent=11 // pred_fallthru
          _
        // Predicated region
        $region45: #{tpu_custom_call.1} parent=11 // pred_check
          %p356 = pneg %p263
        $region46: #{tpu_custom_call.1} parent=11 // pred_check_branch
          %358 = sbr.rel (%p356) target = $region48
        $region47: #{tpu_custom_call.1} parent=11 // pred_region
          _
        $region48: #{tpu_custom_call.1} parent=11 // pred_fallthru
          _
      $region12: #{tpu_custom_call.1} parent=5 // pred_fallthru
        _
      %p359 = scmp.lt.s32.totalorder %s22, 2
      // Predicated region
      $region49: #{tpu_custom_call.1} parent=5 // pred_check
        %p360 = pneg %p359
      $region50: #{tpu_custom_call.1} parent=5 // pred_check_branch
        %362 = sbr.rel (%p360) target = $region52
      $region51: #{tpu_custom_call.1} parent=5 // pred_region
        // Predicated region
        $region53: #{tpu_custom_call.1} parent=51 // pred_check
          %p363 = pneg %p42
        $region54: #{tpu_custom_call.1} parent=51 // pred_check_branch
          %365 = sbr.rel (%p363) target = $region56
        $region55: #{tpu_custom_call.1} parent=51 // pred_region
          %s366 = smul.u32 2, %s22
          %p367 = scmp.lt.s32.totalorder %s366, 3
          %s368 = scalar_select %p367, %s366, 3
          %s369 = smul.addr %s368, 8
          %s370 = scalar_lea.vmem %s0, %s369
          %s371 = smul.u32 2, %s22
        $region56: #{tpu_custom_call.1} parent=51 // pred_fallthru
          _
        // Predicated region
        $region57: #{tpu_custom_call.1} parent=51 // pred_check
          %p372 = pneg %p68
        $region58: #{tpu_custom_call.1} parent=51 // pred_check_branch
          %374 = sbr.rel (%p372) target = $region60
        $region59: #{tpu_custom_call.1} parent=51 // pred_region
          %s375 = smul.u32 2, %s22
          %p376 = scmp.lt.s32.totalorder %s375, 3
          %s377 = scalar_select %p376, %s375, 3
          %s378 = smul.addr %s377, 8
          %s379 = scalar_lea.vmem %s1, %s378
          %s380 = smul.u32 2, %s22
        $region60: #{tpu_custom_call.1} parent=51 // pred_fallthru
          _
      $region52: #{tpu_custom_call.1} parent=5 // pred_fallthru
        _
      %p381 = scmp.le.s32.totalorder 1, %s22
      %p382 = scmp.lt.s32.totalorder %s22, 3
      %p383 = pnand %p381, %p382
      %p384 = pneg %p383
      // Predicated region
      $region61: #{tpu_custom_call.1} parent=5 // pred_check
        _
      $region62: #{tpu_custom_call.1} parent=5 // pred_check_branch
        %386 = sbr.rel (%p383) target = $region64
      $region63: #{tpu_custom_call.1} parent=5 // pred_region
        %s387 = ssub.s32 %s22, 1
        // Predicated region
        $region65: #{tpu_custom_call.1} parent=63 // pred_check
          %p388 = pneg %p95
        $region66: #{tpu_custom_call.1} parent=63 // pred_check_branch
          %390 = sbr.rel (%p388) target = $region68
        $region67: #{tpu_custom_call.1} parent=63 // pred_region
          %391 = dma.done [#allocation3], 128
        $region68: #{tpu_custom_call.1} parent=63 // pred_fallthru
          _
        // Predicated region
        $region69: #{tpu_custom_call.1} parent=63 // pred_check
          %p392 = pneg %p200
        $region70: #{tpu_custom_call.1} parent=63 // pred_check_branch
          %394 = sbr.rel (%p392) target = $region72
        $region71: #{tpu_custom_call.1} parent=63 // pred_region
          %395 = dma.done [#allocation6], 256
        $region72: #{tpu_custom_call.1} parent=63 // pred_fallthru
          _
        // Predicated region
        $region73: #{tpu_custom_call.1} parent=63 // pred_check
          %p396 = pneg %p221
        $region74: #{tpu_custom_call.1} parent=63 // pred_check_branch
          %398 = sbr.rel (%p396) target = $region76
        $region75: #{tpu_custom_call.1} parent=63 // pred_region
          %399 = dma.done [#allocation6], 16
        $region76: #{tpu_custom_call.1} parent=63 // pred_fallthru
          _
        %s400 = smul.u32 2, %s27
        %p401 = scmp.lt.s32.totalorder %s400, 3
        %s402 = scalar_select %p401, %s400, 3
        %s403 = smul.addr %s402, 8
        %s404 = scalar_lea.vmem %s0, %s403
        %p405 = pneg %p48
        %p406 = pneg %p45
        %s407 = smul.u32 2, %s27
        %p408 = scmp.lt.s32.totalorder %s407, 3
        %s409 = scalar_select %p408, %s407, 3
        %s410 = smul.addr %s409, 8
        %s411 = scalar_lea.vmem %s1, %s410
        %p412 = pneg %p74
        %p413 = pneg %p71
        %p414 = pneg %p95
        %p415 = pneg %p92
        %p416 = pneg %p116
        %p417 = pneg %p113
        %p418 = pneg %p137
        %p419 = pneg %p134
        %p420 = pneg %p158
        %p421 = pneg %p155
        %p422 = pneg %p179
        %p423 = pneg %p176
        %p424 = pneg %p200
        %p425 = pneg %p197
        %p426 = pneg %p221
        %p427 = pneg %p218
        %p428 = pneg %p242
        %p429 = pneg %p239
        %p430 = pneg %p263
        %p431 = pneg %p260
        %p432 = pneg %p289
        %p433 = pneg %p286
        %s434 = sand.u32 %s276, 1
        %s435 = scalar_lea.sflag [#allocation4], %s434
        %s436 = sand.u32 %s276, 1
        %s437 = smul.addr %s436, 16
        %s438 = scalar_lea.vmem [#allocation8], %s437
        %s439 = smul.u32 2, %s27
        %p440 = scmp.lt.s32.totalorder %s439, 3
        %s441 = scalar_select %p440, %s439, 3
        %s442 = smul.addr %s441, 8
        %s443 = scalar_lea.vmem %s0, %s442
        %s444 = smul.u32 2, %s27
        %s445 = smul.u32 2, %s27
        %p446 = scmp.lt.s32.totalorder %s445, 3
        %s447 = scalar_select %p446, %s445, 3
        %s448 = smul.addr %s447, 8
        %s449 = scalar_lea.vmem %s1, %s448
        %s450 = smul.u32 2, %s27
        %s451 = smul.u32 2, %s27
        %v453 = vld [vmem:[%s443] sm:$0xff]
        %v454 = vld [vmem:[%s443 + $0x8] sm:$0xff]
        %v455 = vpack.c.bf16 %v454, %v453
        %v456 = vld [vmem:[%s449] sm:$0xff]
        %v457 = vld [vmem:[%s449 + $0x8] sm:$0xff]
        %v458 = vpack.c.bf16 %v457, %v456
        %v459 = vld [vmem:[#allocation2] sm:$0xf]
        %v460 = vld [vmem:[#allocation2 + $0x4] sm:$0xf]
        %v461 = vld [vmem:[%s3] sm:$0x1]
        %v463 = vlaneseq
        %v464 = vshrl.u32 %v463, 7
        %v465 = vsub.s32 0, %v464
        %v466 = vrot.slane %v461, %v465
        %v470 = vunpack.c.l.b16 %v459
        %v471 = vunpack.c.l.b16 %v460
        %v472 = vpack.c.b16 %v471, %v470
        %vm474 = vcmask 130048
        %v476 = vsel %vm474, %v455, 0
        %478 = vmatprep.subr.bf16.mxu0 0
        %479 = vmatpush1.bf16.msra.mxu0 %v472
        %480 = vmatprep.subr.bf16.mxu0 0
        %481 = vmatpush1.bf16.msra.mxu0 0
        %482 = vmatprep.subr.bf16.mxu0 0
        %483 = vmatpush1.bf16.msra.mxu0 0
        %484 = vmatprep.subr.bf16.mxu0 0
        %485 = vmatpush1.bf16.msra.mxu0 0
        %486 = vmatprep.subr.bf16.mxu0 0
        %487 = vmatpush1.bf16.msra.mxu0 0
        %488 = vmatprep.subr.bf16.mxu0 0
        %489 = vmatpush1.bf16.msra.mxu0 0
        %490 = vmatprep.subr.bf16.mxu0 0
        %491 = vmatpush1.bf16.msra.mxu0 0
        %492 = vmatprep.subr.bf16.mxu0 0
        %493 = vmatpush1.bf16.msra.mxu0 0
        %494 = vmatprep.subr.bf16.mxu0 0
        %495 = vmatpush1.bf16.msra.mxu0 0
        %496 = vmatprep.subr.bf16.mxu0 0
        %497 = vmatpush1.bf16.msra.mxu0 0
        %498 = vmatprep.subr.bf16.mxu0 0
        %499 = vmatpush1.bf16.msra.mxu0 0
        %500 = vmatprep.subr.bf16.mxu0 0
        %501 = vmatpush1.bf16.msra.mxu0 0
        %502 = vmatprep.subr.bf16.mxu0 0
        %503 = vmatpush1.bf16.msra.mxu0 0
        %504 = vmatprep.subr.bf16.mxu0 0
        %505 = vmatpush1.bf16.msra.mxu0 0
        %506 = vmatprep.subr.bf16.mxu0 0
        %507 = vmatpush1.bf16.msra.mxu0 0
        %508 = vmatprep.subr.bf16.mxu0 0
        %509 = vmatpush1.bf16.msra.mxu0 0
        %510 = vmatprep.mubr.bf16.mxu0 0
        %511 = vmatmul.mubr.bf16.gmra.mrb[0].mxu0 %v476
        %v512 = vpop.f32.mrb[0].mxu0
        %v513 = vadd.f32 %v466, %v512
        %v514 = vpop.f32.mrb[0].mxu0
        %v515 = vpop.f32.mrb[0].mxu0
        %v516 = vadd.f32 %v466, %v515
        %v517 = vpop.f32.mrb[0].mxu0
        %518 = vdwg.mxu0
        %v519 = vand.u32 2147483647, %v513
        %v520 = vand.u32 2147483647, %v516
        %vm521 = vcmask 261120
        %v522 = vsel %vm521, %v519, 0.0
        %523 = vadd.xlane.f32.xlu0 %v522
        %v524 = vpop.xlane.xlu0 %523
        %v525 = vsel %vm521, %v520, 0.0
        %526 = vadd.xlane.f32.xlu0 %v525
        %v527 = vpop.xlane.xlu0 %526
        %v528 = vrcp.pop 32.0
        %v529 = vmul.f32 %v524, %v528
        %v530 = vmul.f32 %v527, %v528
        %v531 = vmax.f32 %v529, 1e-08
        %v532 = vmax.f32 %v530, 1e-08
        %v533 = vrcp.pop %v531
        %v534 = vrcp.pop %v532
        %v535 = vmul.f32 %v513, %v533
        %v536 = vmul.f32 %v516, %v534
        %v537 = vpack.c.bf16 %v536, %v535
        %v538 = vld [vmem:[%s4] sm:$0xf]
        %v539 = vld [vmem:[%s4 + $0x4] sm:$0xf]
        %v540 = vld [vmem:[%s4 + $0x8] sm:$0xf]
        %v541 = vld [vmem:[%s4 + $0xc] sm:$0xf]
        %v542 = vld [vmem:[%s5] sm:$0xf]
        %v543 = vld [vmem:[%s5 + $0x4] sm:$0xf]
        %v544 = vld [vmem:[%s5 + $0x8] sm:$0xf]
        %v545 = vld [vmem:[%s5 + $0xc] sm:$0xf]
        %v550 = vunpack.c.l.b16 %v542
        %v551 = vunpack.c.l.b16 %v543
        %v552 = vunpack.c.l.b16 %v544
        %v553 = vunpack.c.l.b16 %v545
        %v554 = vpack.c.b16 %v551, %v550
        %v555 = vpack.c.b16 %v553, %v552
        %v559 = vsel %vm521, %v458, 0
        %561 = vmatprep.subr.bf16.mxu0 0
        %562 = vmatpush1.bf16.msra.mxu0 %v554
        %563 = vmatprep.subr.bf16.mxu0 0
        %564 = vmatpush1.bf16.msra.mxu0 %v555
        %565 = vmatprep.subr.bf16.mxu0 0
        %566 = vmatpush1.bf16.msra.mxu0 0
        %567 = vmatprep.subr.bf16.mxu0 0
        %568 = vmatpush1.bf16.msra.mxu0 0
        %569 = vmatprep.subr.bf16.mxu0 0
        %570 = vmatpush1.bf16.msra.mxu0 0
        %571 = vmatprep.subr.bf16.mxu0 0
        %572 = vmatpush1.bf16.msra.mxu0 0
        %573 = vmatprep.subr.bf16.mxu0 0
        %574 = vmatpush1.bf16.msra.mxu0 0
        %575 = vmatprep.subr.bf16.mxu0 0
        %576 = vmatpush1.bf16.msra.mxu0 0
        %577 = vmatprep.subr.bf16.mxu0 0
        %578 = vmatpush1.bf16.msra.mxu0 0
        %579 = vmatprep.subr.bf16.mxu0 0
        %580 = vmatpush1.bf16.msra.mxu0 0
        %581 = vmatprep.subr.bf16.mxu0 0
        %582 = vmatpush1.bf16.msra.mxu0 0
        %583 = vmatprep.subr.bf16.mxu0 0
        %584 = vmatpush1.bf16.msra.mxu0 0
        %585 = vmatprep.subr.bf16.mxu0 0
        %586 = vmatpush1.bf16.msra.mxu0 0
        %587 = vmatprep.subr.bf16.mxu0 0
        %588 = vmatpush1.bf16.msra.mxu0 0
        %589 = vmatprep.subr.bf16.mxu0 0
        %590 = vmatpush1.bf16.msra.mxu0 0
        %591 = vmatprep.subr.bf16.mxu0 0
        %592 = vmatpush1.bf16.msra.mxu0 0
        %593 = vmatprep.mubr.bf16.mxu0 0
        %594 = vmatmul.mubr.bf16.gmra.mrb[0].mxu0 %v559
        %v595 = vpop.f32.mrb[0].mxu0
        %v596 = vadd.f32 0.0, %v595
        %v597 = vpop.f32.mrb[0].mxu0
        %v598 = vpop.f32.mrb[0].mxu0
        %v599 = vadd.f32 0.0, %v598
        %v600 = vpop.f32.mrb[0].mxu0
        %601 = vdwg.mxu0
        %v606 = vunpack.c.l.b16 %v538
        %v607 = vunpack.c.l.b16 %v539
        %v608 = vunpack.c.l.b16 %v540
        %v609 = vunpack.c.l.b16 %v541
        %v610 = vpack.c.b16 %v607, %v606
        %v611 = vpack.c.b16 %v609, %v608
        %v615 = vsel %vm521, %v537, 0
        %617 = vmatprep.subr.bf16.mxu0 0
        %618 = vmatpush1.bf16.msra.mxu0 %v610
        %619 = vmatprep.subr.bf16.mxu0 0
        %620 = vmatpush1.bf16.msra.mxu0 %v611
        %621 = vmatprep.subr.bf16.mxu0 0
        %622 = vmatpush1.bf16.msra.mxu0 0
        %623 = vmatprep.subr.bf16.mxu0 0
        %624 = vmatpush1.bf16.msra.mxu0 0
        %625 = vmatprep.subr.bf16.mxu0 0
        %626 = vmatpush1.bf16.msra.mxu0 0
        %627 = vmatprep.subr.bf16.mxu0 0
        %628 = vmatpush1.bf16.msra.mxu0 0
        %629 = vmatprep.subr.bf16.mxu0 0
        %630 = vmatpush1.bf16.msra.mxu0 0
        %631 = vmatprep.subr.bf16.mxu0 0
        %632 = vmatpush1.bf16.msra.mxu0 0
        %633 = vmatprep.subr.bf16.mxu0 0
        %634 = vmatpush1.bf16.msra.mxu0 0
        %635 = vmatprep.subr.bf16.mxu0 0
        %636 = vmatpush1.bf16.msra.mxu0 0
        %637 = vmatprep.subr.bf16.mxu0 0
        %638 = vmatpush1.bf16.msra.mxu0 0
        %639 = vmatprep.subr.bf16.mxu0 0
        %640 = vmatpush1.bf16.msra.mxu0 0
        %641 = vmatprep.subr.bf16.mxu0 0
        %642 = vmatpush1.bf16.msra.mxu0 0
        %643 = vmatprep.subr.bf16.mxu0 0
        %644 = vmatpush1.bf16.msra.mxu0 0
        %645 = vmatprep.subr.bf16.mxu0 0
        %646 = vmatpush1.bf16.msra.mxu0 0
        %647 = vmatprep.subr.bf16.mxu0 0
        %648 = vmatpush1.bf16.msra.mxu0 0
        %649 = vmatprep.mubr.bf16.mxu0 0
        %650 = vmatmul.mubr.bf16.gmra.mrb[0].mxu0 %v615
        %v651 = vpop.f32.mrb[0].mxu0
        %v652 = vadd.f32 %v596, %v651
        %v653 = vpop.f32.mrb[0].mxu0
        %v654 = vpop.f32.mrb[0].mxu0
        %v655 = vadd.f32 %v599, %v654
        %v656 = vpop.f32.mrb[0].mxu0
        %657 = vdwg.mxu0
        %v658 = vld [vmem:[%s6] sm:$0x1]
        %v660 = vlaneseq
        %v661 = vshrl.u32 %v660, 7
        %v662 = vsub.s32 0, %v661
        %v663 = vrot.slane %v658, %v662
        %v665 = vadd.f32 %v652, %v663
        %v666 = vadd.f32 %v655, %v663
        %v667 = vpack.c.bf16 %v666, %v665
        %v668 = vmax.bf16 %v667, 0
        %v669 = vld [vmem:[#allocation5] sm:$0xf]
        %v670 = vld [vmem:[#allocation5 + $0x4] sm:$0xf]
        %v671 = vld [vmem:[#allocation5 + $0x8] sm:$0xf]
        %v672 = vld [vmem:[#allocation5 + $0xc] sm:$0xf]
        %v673 = vld [vmem:[#allocation7] sm:$0x1]
        %v675 = vlaneseq
        %v676 = vshrl.u32 %v675, 7
        %v677 = vsub.s32 0, %v676
        %v678 = vrot.slane %v673, %v677
        %v684 = vunpack.c.l.b16 %v669
        %v685 = vunpack.c.l.b16 %v670
        %v686 = vunpack.c.l.b16 %v671
        %v687 = vunpack.c.l.b16 %v672
        %v688 = vpack.c.b16 %v685, %v684
        %v689 = vpack.c.b16 %v687, %v686
        %v693 = vsel %vm521, %v668, 0
        %695 = vmatprep.subr.bf16.mxu0 0
        %696 = vmatpush1.bf16.msra.mxu0 %v688
        %697 = vmatprep.subr.bf16.mxu0 0
        %698 = vmatpush1.bf16.msra.mxu0 %v689
        %699 = vmatprep.subr.bf16.mxu0 0
        %700 = vmatpush1.bf16.msra.mxu0 0
        %701 = vmatprep.subr.bf16.mxu0 0
        %702 = vmatpush1.bf16.msra.mxu0 0
        %703 = vmatprep.subr.bf16.mxu0 0
        %704 = vmatpush1.bf16.msra.mxu0 0
        %705 = vmatprep.subr.bf16.mxu0 0
        %706 = vmatpush1.bf16.msra.mxu0 0
        %707 = vmatprep.subr.bf16.mxu0 0
        %708 = vmatpush1.bf16.msra.mxu0 0
        %709 = vmatprep.subr.bf16.mxu0 0
        %710 = vmatpush1.bf16.msra.mxu0 0
        %711 = vmatprep.subr.bf16.mxu0 0
        %712 = vmatpush1.bf16.msra.mxu0 0
        %713 = vmatprep.subr.bf16.mxu0 0
        %714 = vmatpush1.bf16.msra.mxu0 0
        %715 = vmatprep.subr.bf16.mxu0 0
        %716 = vmatpush1.bf16.msra.mxu0 0
        %717 = vmatprep.subr.bf16.mxu0 0
        %718 = vmatpush1.bf16.msra.mxu0 0
        %719 = vmatprep.subr.bf16.mxu0 0
        %720 = vmatpush1.bf16.msra.mxu0 0
        %721 = vmatprep.subr.bf16.mxu0 0
        %722 = vmatpush1.bf16.msra.mxu0 0
        %723 = vmatprep.subr.bf16.mxu0 0
        %724 = vmatpush1.bf16.msra.mxu0 0
        %725 = vmatprep.subr.bf16.mxu0 0
        %726 = vmatpush1.bf16.msra.mxu0 0
        %727 = vmatprep.mubr.bf16.mxu0 0
        %728 = vmatmul.mubr.bf16.gmra.mrb[0].mxu0 %v693
        %v729 = vpop.f32.mrb[0].mxu0
        %v730 = vadd.f32 %v678, %v729
        %v731 = vpop.f32.mrb[0].mxu0
        %v732 = vpop.f32.mrb[0].mxu0
        %v733 = vadd.f32 %v678, %v732
        %v734 = vpop.f32.mrb[0].mxu0
        %735 = vdwg.mxu0
        %v736 = vpack.c.bf16 %v733, %v730
        %v737 = vmax.bf16 %v736, 0
        %v738 = vld [vmem:[%s9] sm:$0xf]
        %v739 = vld [vmem:[%s9 + $0x4] sm:$0xf]
        %v740 = vld [vmem:[%s9 + $0x8] sm:$0xf]
        %v741 = vld [vmem:[%s9 + $0xc] sm:$0xf]
        %v742 = vld [vmem:[%s10] sm:$0x1]
        %v744 = vlaneseq
        %v745 = vshrl.u32 %v744, 7
        %v746 = vsub.s32 0, %v745
        %v747 = vrot.slane %v742, %v746
        %v753 = vunpack.c.l.b16 %v738
        %v754 = vunpack.c.l.b16 %v739
        %v755 = vunpack.c.l.b16 %v740
        %v756 = vunpack.c.l.b16 %v741
        %v757 = vpack.c.b16 %v754, %v753
        %v758 = vpack.c.b16 %v756, %v755
        %v762 = vsel %vm521, %v737, 0
        %764 = vmatprep.subr.bf16.mxu0 0
        %765 = vmatpush1.bf16.msra.mxu0 %v757
        %766 = vmatprep.subr.bf16.mxu0 0
        %767 = vmatpush1.bf16.msra.mxu0 %v758
        %768 = vmatprep.subr.bf16.mxu0 0
        %769 = vmatpush1.bf16.msra.mxu0 0
        %770 = vmatprep.subr.bf16.mxu0 0
        %771 = vmatpush1.bf16.msra.mxu0 0
        %772 = vmatprep.subr.bf16.mxu0 0
        %773 = vmatpush1.bf16.msra.mxu0 0
        %774 = vmatprep.subr.bf16.mxu0 0
        %775 = vmatpush1.bf16.msra.mxu0 0
        %776 = vmatprep.subr.bf16.mxu0 0
        %777 = vmatpush1.bf16.msra.mxu0 0
        %778 = vmatprep.subr.bf16.mxu0 0
        %779 = vmatpush1.bf16.msra.mxu0 0
        %780 = vmatprep.subr.bf16.mxu0 0
        %781 = vmatpush1.bf16.msra.mxu0 0
        %782 = vmatprep.subr.bf16.mxu0 0
        %783 = vmatpush1.bf16.msra.mxu0 0
        %784 = vmatprep.subr.bf16.mxu0 0
        %785 = vmatpush1.bf16.msra.mxu0 0
        %786 = vmatprep.subr.bf16.mxu0 0
        %787 = vmatpush1.bf16.msra.mxu0 0
        %788 = vmatprep.subr.bf16.mxu0 0
        %789 = vmatpush1.bf16.msra.mxu0 0
        %790 = vmatprep.subr.bf16.mxu0 0
        %791 = vmatpush1.bf16.msra.mxu0 0
        %792 = vmatprep.subr.bf16.mxu0 0
        %793 = vmatpush1.bf16.msra.mxu0 0
        %794 = vmatprep.subr.bf16.mxu0 0
        %795 = vmatpush1.bf16.msra.mxu0 0
        %796 = vmatprep.mubr.bf16.mxu0 0
        %797 = vmatmul.mubr.bf16.gmra.mrb[0].mxu0 %v762
        %v798 = vpop.f32.mrb[0].mxu0
        %v799 = vadd.f32 %v747, %v798
        %v800 = vpop.f32.mrb[0].mxu0
        %v801 = vpop.f32.mrb[0].mxu0
        %v802 = vadd.f32 %v747, %v801
        %v803 = vpop.f32.mrb[0].mxu0
        %804 = vdwg.mxu0
        %v805 = vtanh.pop %v799
        %v806 = vtanh.pop %v802
        %807 = vst [vmem:[%s438] sm:$0xff] %v805
        %808 = vst [vmem:[%s438 + $0x8] sm:$0xff] %v806
        %s809 = sand.u32 %s276, 1
        %s810 = scalar_lea.sflag [#allocation4], %s809
        %s811 = sand.u32 %s276, 1
        %s812 = smul.addr %s811, 16
        %s813 = scalar_lea.vmem [#allocation8], %s812
        // Predicated region
        $region77: #{tpu_custom_call.1} parent=63 // pred_check
          %p814 = pneg %p286
        $region78: #{tpu_custom_call.1} parent=63 // pred_check_branch
          %816 = sbr.rel (%p814) target = $region80
        $region79: #{tpu_custom_call.1} parent=63 // pred_region
          %s817 = smul.u32 2, %s27
          %s819 = ssub.s32 256, 256
          %820 = vsyncadd %s810, %s819
          %s821 = smul.addr %s817, 128
          %s822 = scalar_lea.hbm %s11, %s821
          %s823 = sshll.u32 %s813, 4
          %s824 = int_to_ptr.vmem [resolvable:$true] %s823
          %829 = dma.vmem_to_hbm [thread:$0]  %s824, 256, %s822, %s810, 128, 128, 8
        $region80: #{tpu_custom_call.1} parent=63 // pred_fallthru
          _
      $region64: #{tpu_custom_call.1} parent=5 // pred_fallthru
        _
      %p830 = scmp.le.s32.totalorder 2, %s22
      // Predicated region
      $region81: #{tpu_custom_call.1} parent=5 // pred_check
        %p831 = pneg %p830
      $region82: #{tpu_custom_call.1} parent=5 // pred_check_branch
        %833 = sbr.rel (%p831) target = $region84
      $region83: #{tpu_custom_call.1} parent=5 // pred_region
        %s834 = ssub.s32 %s22, 2
        // Predicated region
        $region85: #{tpu_custom_call.1} parent=83 // pred_check
          %p835 = pneg %p292
        $region86: #{tpu_custom_call.1} parent=83 // pred_check_branch
          %837 = sbr.rel (%p835) target = $region88
        $region87: #{tpu_custom_call.1} parent=83 // pred_region
          %s838 = sand.u32 %s277, 1
          %s839 = scalar_lea.sflag [#allocation4], %s838
          %s840 = sand.u32 %s277, 1
          %s841 = smul.addr %s840, 16
          %s842 = scalar_lea.vmem [#allocation8], %s841
          %843 = dma.done %s839, 256
        $region88: #{tpu_custom_call.1} parent=83 // pred_fallthru
          _
      $region84: #{tpu_custom_call.1} parent=5 // pred_fallthru
        _
    $region6: #{tpu_custom_call.1} parent=1 // loop_footer
      %s26 = sadd.s32 1, %s22
    $region7: #{tpu_custom_call.1} parent=1 // loop_footer_branch
      %21 = sbr.rel target = $region3
    $region8: #{tpu_custom_call.1} parent=1 // loop_exit
      _
    %844 = vsyncpa [#allocation3], 1
    %s845 = scalar_lea.sflag [#allocation3], 1
    %846 = vsyncpa %s845, 1
    %847 = vsyncpa [#allocation6], 1
    %848 = vsyncpa [#allocation4], 1
    %s849 = scalar_lea.sflag [#allocation4], 1
    %850 = vsyncpa %s849, 1

// kernel: tpu_custom_call.1
$region0: #{tpu_custom_call.1}
  #allocation0 [shape = 'u32[]', space=smem, size = 0x4, offset = 0x4, fixed_abs, tag = 'smem constant byte address 0x4 - core index']
  #allocation1 [shape = 'u32[144,128]{1,0:T(1,128)}', space=vmem, size = 0x12000, scoped, tag = 'internal scratch']
  %s0 = inlined_call_operand.vmem [shape: f32[32,16], index: 0, kind: input, shape index: {}]
  %s1 = inlined_call_operand.vmem [shape: f32[32,32], index: 1, kind: input, shape index: {}]
  %s2 = inlined_call_operand.hbm [shape: bf16[16,32], index: 2, kind: input, shape index: {}]
  %s3 = inlined_call_operand.vmem [shape: f32[1,32], index: 3, kind: input, shape index: {}]
  %s4 = inlined_call_operand.vmem [shape: bf16[32,32], index: 4, kind: input, shape index: {}]
  %s5 = inlined_call_operand.vmem [shape: bf16[32,32], index: 5, kind: input, shape index: {}]
  %s6 = inlined_call_operand.vmem [shape: f32[1,32], index: 6, kind: input, shape index: {}]
  %s7 = inlined_call_operand.hbm [shape: bf16[32,32], index: 7, kind: input, shape index: {}]
  %s8 = inlined_call_operand.hbm [shape: f32[1,32], index: 8, kind: input, shape index: {}]
  %s9 = inlined_call_operand.vmem [shape: bf16[32,128], index: 9, kind: input, shape index: {}]
  %s10 = inlined_call_operand.vmem [shape: f32[1,128], index: 10, kind: input, shape index: {}]
  %s11 = inlined_call_operand.hbm [shape: f32[32,128], index: 11, kind: output, shape index: {}]
  %s12 = sld [smem:[#allocation0]]
  $region89: #{tpu_custom_call.1} parent=0
    _
  %s14 = ssub.s32 1, %s12
  %s15 = scalar_select 0, %s14, %s12
  $region1: #{tpu_custom_call.1} parent=0
    #allocation2 [shape = 'u8[4096]{0}', space=vmem, size = 0x1000, scoped, tag = 'input window, operand 2, single buffered']
    #allocation3 [shape = 's32[2]{0}', space=sflag, size = 0x8, scoped, tag = 'scoped memory for tpu_custom_call.1']
    #allocation4 [shape = 's32[2]{0}', space=sflag, size = 0x8, scoped, tag = 'scoped memory for tpu_custom_call.1']
    #allocation5 [shape = 'u8[8192]{0}', space=vmem, size = 0x2000, scoped, tag = 'input window, operand 7, single buffered']
    #allocation6 [shape = 's32[1]{0}', space=sflag, size = 0x4, scoped, tag = 'scoped memory for tpu_custom_call.1']
    #allocation7 [shape = 'u8[512]{0}', space=vmem, size = 0x400, scoped, tag = 'input window, operand 8, single buffered']
    #allocation8 [shape = 'u8[16384]{0}', space=vmem, size = 0x4000, scoped, tag = 'output window, operand 0']
    %16 = vsyncpa [#allocation3], 0
    %17 = vsyncpa [#allocation6], 0
    %18 = vsyncpa [#allocation4], 0
    %s19 = scalar_lea.sflag [#allocation4], 1
    %20 = vsyncpa %s19, 0
    loop: start=0, step=1, limit=4
    $region2: #{tpu_custom_call.1} parent=1 // loop_pre_header
      _
    $region3: #{tpu_custom_call.1} parent=1 // loop_header
      %s22 = sphi 0, %s26
      %p23 = scmp.ge.s32.totalorder %s22, 4
      %s32 = sphi 0, %s34
      %s35 = sphi 0, %s32
      %s36 = sphi 0, %s35
      %s52 = sphi 0, %s36
      %s58 = sphi 0, %s60
      %s61 = sphi 0, %s58
      %s62 = sphi 0, %s61
      %s78 = sphi 0, %s62
      %s82 = sphi 0, %s82
      %s84 = sphi 0, %s82
      %s85 = sphi 0, %s84
      %s99 = sphi 0, %s85
      %s103 = sphi 0, %s103
      %s105 = sphi 0, %s103
      %s106 = sphi 0, %s105
      %s120 = sphi 0, %s106
      %s124 = sphi 0, %s124
      %s126 = sphi 0, %s124
      %s127 = sphi 0, %s126
      %s141 = sphi 0, %s127
      %s145 = sphi 0, %s145
      %s147 = sphi 0, %s145
      %s148 = sphi 0, %s147
      %s162 = sphi 0, %s148
      %s166 = sphi 0, %s166
      %s168 = sphi 0, %s166
      %s169 = sphi 0, %s168
      %s183 = sphi 0, %s169
      %s187 = sphi 0, %s187
      %s189 = sphi 0, %s187
      %s190 = sphi 0, %s189
      %s204 = sphi 0, %s190
      %s208 = sphi 0, %s208
      %s210 = sphi 0, %s208
      %s211 = sphi 0, %s210
      %s225 = sphi 0, %s211
      %s229 = sphi 0, %s229
      %s231 = sphi 0, %s229
      %s232 = sphi 0, %s231
      %s246 = sphi 0, %s232
      %s250 = sphi 0, %s250
      %s252 = sphi 0, %s250
      %s253 = sphi 0, %s252
      %s267 = sphi 0, %s253
      %s273 = sphi 0, %s275
      %s276 = sphi 0, %s273
      %s277 = sphi 0, %s276
      %s293 = sphi 0, %s277
    $region4: #{tpu_custom_call.1} parent=1 // loop_header_branch
      %25 = sbr.rel (%p23) target = $region8
    $region5: #{tpu_custom_call.1} parent=1 // loop_body
      %s27 = ssub.s32 %s22, 1
      %s28 = ssub.s32 %s22, 2
      %s29 = sadd.s32 %s22, 1
      %s30 = ssub.s32 %s22, %s29
      %p31 = scmp.eq.s32.totalorder %s30, 0
      %s33 = sadd.s32 %s32, 1
      %s34 = scalar_select %p31, %s32, %s33
      %p37 = pneg %p31
      %p38 = scmp.eq.s32.totalorder %s22, 1
      %p39 = por %p37, %p38
      %p40 = scmp.ne.s32.totalorder %s32, %s35
      %p41 = scmp.eq.s32.totalorder %s22, 0
      %p42 = por %p40, %p41
      %p43 = scmp.ne.s32.totalorder %s32, %s35
      %p44 = scmp.eq.s32.totalorder %s27, 1
      %p45 = por %p43, %p44
      %p46 = scmp.ne.s32.totalorder %s35, %s36
      %p47 = scmp.eq.s32.totalorder %s27, 0
      %p48 = por %p46, %p47
      %p49 = scmp.ne.s32.totalorder %s35, %s36
      %p50 = scmp.eq.s32.totalorder %s28, 1
      %p51 = por %p49, %p50
      %p53 = scmp.ne.s32.totalorder %s36, %s52
      %p54 = scmp.eq.s32.totalorder %s28, 0
      %p55 = por %p53, %p54
      %s56 = ssub.s32 %s22, %s29
      %p57 = scmp.eq.s32.totalorder %s56, 0
      %s59 = sadd.s32 %s58, 1
      %s60 = scalar_select %p57, %s58, %s59
      %p63 = pneg %p57
      %p64 = scmp.eq.s32.totalorder %s22, 1
      %p65 = por %p63, %p64
      %p66 = scmp.ne.s32.totalorder %s58, %s61
      %p67 = scmp.eq.s32.totalorder %s22, 0
      %p68 = por %p66, %p67
      %p69 = scmp.ne.s32.totalorder %s58, %s61
      %p70 = scmp.eq.s32.totalorder %s27, 1
      %p71 = por %p69, %p70
      %p72 = scmp.ne.s32.totalorder %s61, %s62
      %p73 = scmp.eq.s32.totalorder %s27, 0
      %p74 = por %p72, %p73
      %p75 = scmp.ne.s32.totalorder %s61, %s62
      %p76 = scmp.eq.s32.totalorder %s28, 1
      %p77 = por %p75, %p76
      %p79 = scmp.ne.s32.totalorder %s62, %s78
      %p80 = scmp.eq.s32.totalorder %s28, 0
      %p81 = por %p79, %p80
      %s83 = sadd.s32 %s82, 1
      %p86 = scmp.eq.s32.totalorder %s22, 1
      %p87 = scmp.ne.s32.totalorder %s82, %s84
      %p88 = scmp.eq.s32.totalorder %s22, 0
      %p89 = por %p87, %p88
      %p90 = scmp.ne.s32.totalorder %s82, %s84
      %p91 = scmp.eq.s32.totalorder %s27, 1
      %p92 = por %p90, %p91
      %p93 = scmp.ne.s32.totalorder %s84, %s85
      %p94 = scmp.eq.s32.totalorder %s27, 0
      %p95 = por %p93, %p94
      %p96 = scmp.ne.s32.totalorder %s84, %s85
      %p97 = scmp.eq.s32.totalorder %s28, 1
      %p98 = por %p96, %p97
      %p100 = scmp.ne.s32.totalorder %s85, %s99
      %p101 = scmp.eq.s32.totalorder %s28, 0
      %p102 = por %p100, %p101
      %s104 = sadd.s32 %s103, 1
      %p107 = scmp.eq.s32.totalorder %s22, 1
      %p108 = scmp.ne.s32.totalorder %s103, %s105
      %p109 = scmp.eq.s32.totalorder %s22, 0
      %p110 = por %p108, %p109
      %p111 = scmp.ne.s32.totalorder %s103, %s105
      %p112 = scmp.eq.s32.totalorder %s27, 1
      %p113 = por %p111, %p112
      %p114 = scmp.ne.s32.totalorder %s105, %s106
      %p115 = scmp.eq.s32.totalorder %s27, 0
      %p116 = por %p114, %p115
      %p117 = scmp.ne.s32.totalorder %s105, %s106
      %p118 = scmp.eq.s32.totalorder %s28, 1
      %p119 = por %p117, %p118
      %p121 = scmp.ne.s32.totalorder %s106, %s120
      %p122 = scmp.eq.s32.totalorder %s28, 0
      %p123 = por %p121, %p122
      %s125 = sadd.s32 %s124, 1
      %p128 = scmp.eq.s32.totalorder %s22, 1
      %p129 = scmp.ne.s32.totalorder %s124, %s126
      %p130 = scmp.eq.s32.totalorder %s22, 0
      %p131 = por %p129, %p130
      %p132 = scmp.ne.s32.totalorder %s124, %s126
      %p133 = scmp.eq.s32.totalorder %s27, 1
      %p134 = por %p132, %p133
      %p135 = scmp.ne.s32.totalorder %s126, %s127
      %p136 = scmp.eq.s32.totalorder %s27, 0
      %p137 = por %p135, %p136
      %p138 = scmp.ne.s32.totalorder %s126, %s127
      %p139 = scmp.eq.s32.totalorder %s28, 1
      %p140 = por %p138, %p139
      %p142 = scmp.ne.s32.totalorder %s127, %s141
      %p143 = scmp.eq.s32.totalorder %s28, 0
      %p144 = por %p142, %p143
      %s146 = sadd.s32 %s145, 1
      %p149 = scmp.eq.s32.totalorder %s22, 1
      %p150 = scmp.ne.s32.totalorder %s145, %s147
      %p151 = scmp.eq.s32.totalorder %s22, 0
      %p152 = por %p150, %p151
      %p153 = scmp.ne.s32.totalorder %s145, %s147
      %p154 = scmp.eq.s32.totalorder %s27, 1
      %p155 = por %p153, %p154
      %p156 = scmp.ne.s32.totalorder %s147, %s148
      %p157 = scmp.eq.s32.totalorder %s27, 0
      %p158 = por %p156, %p157
      %p159 = scmp.ne.s32.totalorder %s147, %s148
      %p160 = scmp.eq.s32.totalorder %s28, 1
      %p161 = por %p159, %p160
      %p163 = scmp.ne.s32.totalorder %s148, %s162
      %p164 = scmp.eq.s32.totalorder %s28, 0
      %p165 = por %p163, %p164
      %s167 = sadd.s32 %s166, 1
      %p170 = scmp.eq.s32.totalorder %s22, 1
      %p171 = scmp.ne.s32.totalorder %s166, %s168
      %p172 = scmp.eq.s32.totalorder %s22, 0
      %p173 = por %p171, %p172
      %p174 = scmp.ne.s32.totalorder %s166, %s168
      %p175 = scmp.eq.s32.totalorder %s27, 1
      %p176 = por %p174, %p175
      %p177 = scmp.ne.s32.totalorder %s168, %s169
      %p178 = scmp.eq.s32.totalorder %s27, 0
      %p179 = por %p177, %p178
      %p180 = scmp.ne.s32.totalorder %s168, %s169
      %p181 = scmp.eq.s32.totalorder %s28, 1
      %p182 = por %p180, %p181
      %p184 = scmp.ne.s32.totalorder %s169, %s183
      %p185 = scmp.eq.s32.totalorder %s28, 0
      %p186 = por %p184, %p185
      %s188 = sadd.s32 %s187, 1
      %p191 = scmp.eq.s32.totalorder %s22, 1
      %p192 = scmp.ne.s32.totalorder %s187, %s189
      %p193 = scmp.eq.s32.totalorder %s22, 0
      %p194 = por %p192, %p193
      %p195 = scmp.ne.s32.totalorder %s187, %s189
      %p196 = scmp.eq.s32.totalorder %s27, 1
      %p197 = por %p195, %p196
      %p198 = scmp.ne.s32.totalorder %s189, %s190
      %p199 = scmp.eq.s32.totalorder %s27, 0
      %p200 = por %p198, %p199
      %p201 = scmp.ne.s32.totalorder %s189, %s190
      %p202 = scmp.eq.s32.totalorder %s28, 1
      %p203 = por %p201, %p202
      %p205 = scmp.ne.s32.totalorder %s190, %s204
      %p206 = scmp.eq.s32.totalorder %s28, 0
      %p207 = por %p205, %p206
      %s209 = sadd.s32 %s208, 1
      %p212 = scmp.eq.s32.totalorder %s22, 1
      %p213 = scmp.ne.s32.totalorder %s208, %s210
      %p214 = scmp.eq.s32.totalorder %s22, 0
      %p215 = por %p213, %p214
      %p216 = scmp.ne.s32.totalorder %s208, %s210
      %p217 = scmp.eq.s32.totalorder %s27, 1
      %p218 = por %p216, %p217
      %p219 = scmp.ne.s32.totalorder %s210, %s211
      %p220 = scmp.eq.s32.totalorder %s27, 0
      %p221 = por %p219, %p220
      %p222 = scmp.ne.s32.totalorder %s210, %s211
      %p223 = scmp.eq.s32.totalorder %s28, 1
      %p224 = por %p222, %p223
      %p226 = scmp.ne.s32.totalorder %s211, %s225
      %p227 = scmp.eq.s32.totalorder %s28, 0
      %p228 = por %p226, %p227
      %s230 = sadd.s32 %s229, 1
      %p233 = scmp.eq.s32.totalorder %s22, 1
      %p234 = scmp.ne.s32.totalorder %s229, %s231
      %p235 = scmp.eq.s32.totalorder %s22, 0
      %p236 = por %p234, %p235
      %p237 = scmp.ne.s32.totalorder %s229, %s231
      %p238 = scmp.eq.s32.totalorder %s27, 1
      %p239 = por %p237, %p238
      %p240 = scmp.ne.s32.totalorder %s231, %s232
      %p241 = scmp.eq.s32.totalorder %s27, 0
      %p242 = por %p240, %p241
      %p243 = scmp.ne.s32.totalorder %s231, %s232
      %p244 = scmp.eq.s32.totalorder %s28, 1
      %p245 = por %p243, %p244
      %p247 = scmp.ne.s32.totalorder %s232, %s246
      %p248 = scmp.eq.s32.totalorder %s28, 0
      %p249 = por %p247, %p248
      %s251 = sadd.s32 %s250, 1
      %p254 = scmp.eq.s32.totalorder %s22, 1
      %p255 = scmp.ne.s32.totalorder %s250, %s252
      %p256 = scmp.eq.s32.totalorder %s22, 0
      %p257 = por %p255, %p256
      %p258 = scmp.ne.s32.totalorder %s250, %s252
      %p259 = scmp.eq.s32.totalorder %s27, 1
      %p260 = por %p258, %p259
      %p261 = scmp.ne.s32.totalorder %s252, %s253
      %p262 = scmp.eq.s32.totalorder %s27, 0
      %p263 = por %p261, %p262
      %p264 = scmp.ne.s32.totalorder %s252, %s253
      %p265 = scmp.eq.s32.totalorder %s28, 1
      %p266 = por %p264, %p265
      %p268 = scmp.ne.s32.totalorder %s253, %s267
      %p269 = scmp.eq.s32.totalorder %s28, 0
      %p270 = por %p268, %p269
      %s271 = ssub.s32 %s22, %s29
      %p272 = scmp.eq.s32.totalorder %s271, 0
      %s274 = sadd.s32 %s273, 1
      %s275 = scalar_select %p272, %s273, %s274
      %p278 = pneg %p272
      %p279 = scmp.eq.s32.totalorder %s22, 1
      %p280 = por %p278, %p279
      %p281 = scmp.ne.s32.totalorder %s273, %s276
      %p282 = scmp.eq.s32.totalorder %s22, 0
      %p283 = por %p281, %p282
      %p284 = scmp.ne.s32.totalorder %s273, %s276
      %p285 = scmp.eq.s32.totalorder %s27, 1
      %p286 = por %p284, %p285
      %p287 = scmp.ne.s32.totalorder %s276, %s277
      %p288 = scmp.eq.s32.totalorder %s27, 0
      %p289 = por %p287, %p288
      %p290 = scmp.ne.s32.totalorder %s276, %s277
      %p291 = scmp.eq.s32.totalorder %s28, 1
      %p292 = por %p290, %p291
      %p294 = scmp.ne.s32.totalorder %s277, %s293
      %p295 = scmp.eq.s32.totalorder %s28, 0
      %p296 = por %p294, %p295
      %p297 = scmp.le.s32.totalorder 1, %s22
      %p298 = scmp.lt.s32.totalorder %s22, 3
      %p299 = pnand %p297, %p298
      %p300 = pneg %p299
      // Predicated region
      $region9: #{tpu_custom_call.1} parent=5 // pred_check
        _
      $region10: #{tpu_custom_call.1} parent=5 // pred_check_branch
        %302 = sbr.rel (%p299) target = $region12
      $region11: #{tpu_custom_call.1} parent=5 // pred_region
        %s303 = ssub.s32 %s22, 1
        // Predicated region
        $region13: #{tpu_custom_call.1} parent=11 // pred_check
          %p304 = pneg %p95
        $region14: #{tpu_custom_call.1} parent=11 // pred_check_branch
          %306 = sbr.rel (%p304) target = $region16
        $region15: #{tpu_custom_call.1} parent=11 // pred_region
          %s308 = ssub.s32 128, 128
          %309 = vsyncadd [#allocation3], %s308
          %s310 = sshll.u32 [#allocation2], 4
          %s311 = int_to_ptr.vmem [resolvable:$true] %s310
          %316 = dma.hbm_to_vmem [thread:$0]  %s2, 128, %s311, [#allocation3], 64, 64, 4
        $region16: #{tpu_custom_call.1} parent=11 // pred_fallthru
          _
        // Predicated region
        $region17: #{tpu_custom_call.1} parent=11 // pred_check
          %p317 = pneg %p116
        $region18: #{tpu_custom_call.1} parent=11 // pred_check_branch
          %319 = sbr.rel (%p317) target = $region20
        $region19: #{tpu_custom_call.1} parent=11 // pred_region
          _
        $region20: #{tpu_custom_call.1} parent=11 // pred_fallthru
          _
        // Predicated region
        $region21: #{tpu_custom_call.1} parent=11 // pred_check
          %p320 = pneg %p137
        $region22: #{tpu_custom_call.1} parent=11 // pred_check_branch
          %322 = sbr.rel (%p320) target = $region24
        $region23: #{tpu_custom_call.1} parent=11 // pred_region
          _
        $region24: #{tpu_custom_call.1} parent=11 // pred_fallthru
          _
        // Predicated region
        $region25: #{tpu_custom_call.1} parent=11 // pred_check
          %p323 = pneg %p158
        $region26: #{tpu_custom_call.1} parent=11 // pred_check_branch
          %325 = sbr.rel (%p323) target = $region28
        $region27: #{tpu_custom_call.1} parent=11 // pred_region
          _
        $region28: #{tpu_custom_call.1} parent=11 // pred_fallthru
          _
        // Predicated region
        $region29: #{tpu_custom_call.1} parent=11 // pred_check
          %p326 = pneg %p179
        $region30: #{tpu_custom_call.1} parent=11 // pred_check_branch
          %328 = sbr.rel (%p326) target = $region32
        $region31: #{tpu_custom_call.1} parent=11 // pred_region
          _
        $region32: #{tpu_custom_call.1} parent=11 // pred_fallthru
          _
        // Predicated region
        $region33: #{tpu_custom_call.1} parent=11 // pred_check
          %p329 = pneg %p200
        $region34: #{tpu_custom_call.1} parent=11 // pred_check_branch
          %331 = sbr.rel (%p329) target = $region36
        $region35: #{tpu_custom_call.1} parent=11 // pred_region
          %s333 = ssub.s32 256, 256
          %334 = vsyncadd [#allocation6], %s333
          %s335 = sshll.u32 [#allocation5], 4
          %s336 = int_to_ptr.vmem [resolvable:$true] %s335
          %341 = dma.hbm_to_vmem [thread:$0]  %s7, 256, %s336, [#allocation6], 64, 64, 4
        $region36: #{tpu_custom_call.1} parent=11 // pred_fallthru
          _
        // Predicated region
        $region37: #{tpu_custom_call.1} parent=11 // pred_check
          %p342 = pneg %p221
        $region38: #{tpu_custom_call.1} parent=11 // pred_check_branch
          %344 = sbr.rel (%p342) target = $region40
        $region39: #{tpu_custom_call.1} parent=11 // pred_region
          %s346 = ssub.s32 16, 16
          %347 = vsyncadd [#allocation6], %s346
          %s349 = sshll.u32 [#allocation7], 4
          %s350 = int_to_ptr.vmem [resolvable:$true] %s349
          %352 = dma.hbm_to_vmem [thread:$0]  %s8, 16, %s350, [#allocation6]
        $region40: #{tpu_custom_call.1} parent=11 // pred_fallthru
          _
        // Predicated region
        $region41: #{tpu_custom_call.1} parent=11 // pred_check
          %p353 = pneg %p242
        $region42: #{tpu_custom_call.1} parent=11 // pred_check_branch
          %355 = sbr.rel (%p353) target = $region44
        $region43: #{tpu_custom_call.1} parent=11 // pred_region
          _
        $region44: #{tpu_custom_call.1} parent=11 // pred_fallthru
          _
        // Predicated region
        $region45: #{tpu_custom_call.1} parent=11 // pred_check
          %p356 = pneg %p263
        $region46: #{tpu_custom_call.1} parent=11 // pred_check_branch
          %358 = sbr.rel (%p356) target = $region48
        $region47: #{tpu_custom_call.1} parent=11 // pred_region
          _
        $region48: #{tpu_custom_call.1} parent=11 // pred_fallthru
          _
      $region12: #{tpu_custom_call.1} parent=5 // pred_fallthru
        _
      %p359 = scmp.lt.s32.totalorder %s22, 2
      // Predicated region
      $region49: #{tpu_custom_call.1} parent=5 // pred_check
        %p360 = pneg %p359
      $region50: #{tpu_custom_call.1} parent=5 // pred_check_branch
        %362 = sbr.rel (%p360) target = $region52
      $region51: #{tpu_custom_call.1} parent=5 // pred_region
        // Predicated region
        $region53: #{tpu_custom_call.1} parent=51 // pred_check
          %p363 = pneg %p42
        $region54: #{tpu_custom_call.1} parent=51 // pred_check_branch
          %365 = sbr.rel (%p363) target = $region56
        $region55: #{tpu_custom_call.1} parent=51 // pred_region
          %s366 = smul.u32 2, %s22
          %p367 = scmp.lt.s32.totalorder %s366, 3
          %s368 = scalar_select %p367, %s366, 3
          %s369 = smul.addr %s368, 8
          %s370 = scalar_lea.vmem %s0, %s369
          %s371 = smul.u32 2, %s22
        $region56: #{tpu_custom_call.1} parent=51 // pred_fallthru
          _
        // Predicated region
        $region57: #{tpu_custom_call.1} parent=51 // pred_check
          %p372 = pneg %p68
        $region58: #{tpu_custom_call.1} parent=51 // pred_check_branch
          %374 = sbr.rel (%p372) target = $region60
        $region59: #{tpu_custom_call.1} parent=51 // pred_region
          %s375 = smul.u32 2, %s22
          %p376 = scmp.lt.s32.totalorder %s375, 3
          %s377 = scalar_select %p376, %s375, 3
          %s378 = smul.addr %s377, 8
          %s379 = scalar_lea.vmem %s1, %s378
          %s380 = smul.u32 2, %s22
        $region60: #{tpu_custom_call.1} parent=51 // pred_fallthru
          _
      $region52: #{tpu_custom_call.1} parent=5 // pred_fallthru
        _
      %p381 = scmp.le.s32.totalorder 1, %s22
      %p382 = scmp.lt.s32.totalorder %s22, 3
      %p383 = pnand %p381, %p382
      %p384 = pneg %p383
      // Predicated region
      $region61: #{tpu_custom_call.1} parent=5 // pred_check
        _
      $region62: #{tpu_custom_call.1} parent=5 // pred_check_branch
        %386 = sbr.rel (%p383) target = $region64
      $region63: #{tpu_custom_call.1} parent=5 // pred_region
        %s387 = ssub.s32 %s22, 1
        // Predicated region
        $region65: #{tpu_custom_call.1} parent=63 // pred_check
          %p388 = pneg %p95
        $region66: #{tpu_custom_call.1} parent=63 // pred_check_branch
          %390 = sbr.rel (%p388) target = $region68
        $region67: #{tpu_custom_call.1} parent=63 // pred_region
          %391 = dma.done [#allocation3], 128
        $region68: #{tpu_custom_call.1} parent=63 // pred_fallthru
          _
        // Predicated region
        $region69: #{tpu_custom_call.1} parent=63 // pred_check
          %p392 = pneg %p200
        $region70: #{tpu_custom_call.1} parent=63 // pred_check_branch
          %394 = sbr.rel (%p392) target = $region72
        $region71: #{tpu_custom_call.1} parent=63 // pred_region
          %395 = dma.done [#allocation6], 256
        $region72: #{tpu_custom_call.1} parent=63 // pred_fallthru
          _
        // Predicated region
        $region73: #{tpu_custom_call.1} parent=63 // pred_check
          %p396 = pneg %p221
        $region74: #{tpu_custom_call.1} parent=63 // pred_check_branch
          %398 = sbr.rel (%p396) target = $region76
        $region75: #{tpu_custom_call.1} parent=63 // pred_region
          %399 = dma.done [#allocation6], 16
        $region76: #{tpu_custom_call.1} parent=63 // pred_fallthru
          _
        %s400 = smul.u32 2, %s27
        %p401 = scmp.lt.s32.totalorder %s400, 3
        %s402 = scalar_select %p401, %s400, 3
        %s403 = smul.addr %s402, 8
        %s404 = scalar_lea.vmem %s0, %s403
        %p405 = pneg %p48
        %p406 = pneg %p45
        %s407 = smul.u32 2, %s27
        %p408 = scmp.lt.s32.totalorder %s407, 3
        %s409 = scalar_select %p408, %s407, 3
        %s410 = smul.addr %s409, 8
        %s411 = scalar_lea.vmem %s1, %s410
        %p412 = pneg %p74
        %p413 = pneg %p71
        %p414 = pneg %p95
        %p415 = pneg %p92
        %p416 = pneg %p116
        %p417 = pneg %p113
        %p418 = pneg %p137
        %p419 = pneg %p134
        %p420 = pneg %p158
        %p421 = pneg %p155
        %p422 = pneg %p179
        %p423 = pneg %p176
        %p424 = pneg %p200
        %p425 = pneg %p197
        %p426 = pneg %p221
        %p427 = pneg %p218
        %p428 = pneg %p242
        %p429 = pneg %p239
        %p430 = pneg %p263
        %p431 = pneg %p260
        %p432 = pneg %p289
        %p433 = pneg %p286
        %s434 = sand.u32 %s276, 1
        %s435 = scalar_lea.sflag [#allocation4], %s434
        %s436 = sand.u32 %s276, 1
        %s437 = smul.addr %s436, 16
        %s438 = scalar_lea.vmem [#allocation8], %s437
        %s439 = smul.u32 2, %s27
        %p440 = scmp.lt.s32.totalorder %s439, 3
        %s441 = scalar_select %p440, %s439, 3
        %s442 = smul.addr %s441, 8
        %s443 = scalar_lea.vmem %s0, %s442
        %s444 = smul.u32 2, %s27
        %s445 = smul.u32 2, %s27
        %p446 = scmp.lt.s32.totalorder %s445, 3
        %s447 = scalar_select %p446, %s445, 3
        %s448 = smul.addr %s447, 8
        %s449 = scalar_lea.vmem %s1, %s448
        %s450 = smul.u32 2, %s27
        %s451 = smul.u32 2, %s27
        %v453 = vld [vmem:[%s443] sm:$0xff]
        %v454 = vld [vmem:[%s443 + $0x8] sm:$0xff]
        %v455 = vpack.c.bf16 %v454, %v453
        %v456 = vld [vmem:[%s449] sm:$0xff]
        %v457 = vld [vmem:[%s449 + $0x8] sm:$0xff]
        %v458 = vpack.c.bf16 %v457, %v456
        %v459 = vld [vmem:[#allocation2] sm:$0xf]
        %v460 = vld [vmem:[#allocation2 + $0x4] sm:$0xf]
        %v461 = vld [vmem:[%s3] sm:$0x1]
        %v463 = vlaneseq
        %v464 = vshrl.u32 %v463, 7
        %v465 = vsub.s32 0, %v464
        %v466 = vrot.slane %v461, %v465
        %v470 = vunpack.c.l.b16 %v459
        %v471 = vunpack.c.l.b16 %v460
        %v472 = vpack.c.b16 %v471, %v470
        %vm474 = vcmask 130048
        %v476 = vsel %vm474, %v455, 0
        %478 = vmatprep.subr.bf16.mxu0 0
        %479 = vmatpush1.bf16.msra.mxu0 %v472
        %480 = vmatprep.subr.bf16.mxu0 0
        %481 = vmatpush1.bf16.msra.mxu0 0
        %482 = vmatprep.subr.bf16.mxu0 0
        %483 = vmatpush1.bf16.msra.mxu0 0
        %484 = vmatprep.subr.bf16.mxu0 0
        %485 = vmatpush1.bf16.msra.mxu0 0
        %486 = vmatprep.subr.bf16.mxu0 0
        %487 = vmatpush1.bf16.msra.mxu0 0
        %488 = vmatprep.subr.bf16.mxu0 0
        %489 = vmatpush1.bf16.msra.mxu0 0
        %490 = vmatprep.subr.bf16.mxu0 0
        %491 = vmatpush1.bf16.msra.mxu0 0
        %492 = vmatprep.subr.bf16.mxu0 0
        %493 = vmatpush1.bf16.msra.mxu0 0
        %494 = vmatprep.subr.bf16.mxu0 0
        %495 = vmatpush1.bf16.msra.mxu0 0
        %496 = vmatprep.subr.bf16.mxu0 0
        %497 = vmatpush1.bf16.msra.mxu0 0
        %498 = vmatprep.subr.bf16.mxu0 0
        %499 = vmatpush1.bf16.msra.mxu0 0
        %500 = vmatprep.subr.bf16.mxu0 0
        %501 = vmatpush1.bf16.msra.mxu0 0
        %502 = vmatprep.subr.bf16.mxu0 0
        %503 = vmatpush1.bf16.msra.mxu0 0
        %504 = vmatprep.subr.bf16.mxu0 0
        %505 = vmatpush1.bf16.msra.mxu0 0
        %506 = vmatprep.subr.bf16.mxu0 0
        %507 = vmatpush1.bf16.msra.mxu0 0
        %508 = vmatprep.subr.bf16.mxu0 0
        %509 = vmatpush1.bf16.msra.mxu0 0
        %510 = vmatprep.mubr.bf16.mxu0 0
        %511 = vmatmul.mubr.bf16.gmra.mrb[0].mxu0 %v476
        %v512 = vpop.f32.mrb[0].mxu0
        %v513 = vadd.f32 %v466, %v512
        %v514 = vpop.f32.mrb[0].mxu0
        %v515 = vpop.f32.mrb[0].mxu0
        %v516 = vadd.f32 %v466, %v515
        %v517 = vpop.f32.mrb[0].mxu0
        %518 = vdwg.mxu0
        %v519 = vand.u32 2147483647, %v513
        %v520 = vand.u32 2147483647, %v516
        %vm521 = vcmask 261120
        %v522 = vsel %vm521, %v519, 0.0
        %523 = vadd.xlane.f32.xlu0 %v522
        %v524 = vpop.xlane.xlu0 %523
        %v525 = vsel %vm521, %v520, 0.0
        %526 = vadd.xlane.f32.xlu0 %v525
        %v527 = vpop.xlane.xlu0 %526
        %v528 = vrcp.pop 32.0
        %v529 = vmul.f32 %v524, %v528
        %v530 = vmul.f32 %v527, %v528
        %v531 = vmax.f32 %v529, 1e-08
        %v532 = vmax.f32 %v530, 1e-08
        %v533 = vrcp.pop %v531
        %v534 = vrcp.pop %v532
        %v535 = vmul.f32 %v513, %v533
        %v536 = vmul.f32 %v516, %v534
        %v537 = vpack.c.bf16 %v536, %v535
        %v538 = vld [vmem:[%s4] sm:$0xf]
        %v539 = vld [vmem:[%s4 + $0x4] sm:$0xf]
        %v540 = vld [vmem:[%s4 + $0x8] sm:$0xf]
        %v541 = vld [vmem:[%s4 + $0xc] sm:$0xf]
        %v542 = vld [vmem:[%s5] sm:$0xf]
        %v543 = vld [vmem:[%s5 + $0x4] sm:$0xf]
        %v544 = vld [vmem:[%s5 + $0x8] sm:$0xf]
        %v545 = vld [vmem:[%s5 + $0xc] sm:$0xf]
        %v550 = vunpack.c.l.b16 %v542
        %v551 = vunpack.c.l.b16 %v543
        %v552 = vunpack.c.l.b16 %v544
        %v553 = vunpack.c.l.b16 %v545
        %v554 = vpack.c.b16 %v551, %v550
        %v555 = vpack.c.b16 %v553, %v552
        %v559 = vsel %vm521, %v458, 0
        %561 = vmatprep.subr.bf16.mxu0 0
        %562 = vmatpush1.bf16.msra.mxu0 %v554
        %563 = vmatprep.subr.bf16.mxu0 0
        %564 = vmatpush1.bf16.msra.mxu0 %v555
        %565 = vmatprep.subr.bf16.mxu0 0
        %566 = vmatpush1.bf16.msra.mxu0 0
        %567 = vmatprep.subr.bf16.mxu0 0
        %568 = vmatpush1.bf16.msra.mxu0 0
        %569 = vmatprep.subr.bf16.mxu0 0
        %570 = vmatpush1.bf16.msra.mxu0 0
        %571 = vmatprep.subr.bf16.mxu0 0
        %572 = vmatpush1.bf16.msra.mxu0 0
        %573 = vmatprep.subr.bf16.mxu0 0
        %574 = vmatpush1.bf16.msra.mxu0 0
        %575 = vmatprep.subr.bf16.mxu0 0
        %576 = vmatpush1.bf16.msra.mxu0 0
        %577 = vmatprep.subr.bf16.mxu0 0
        %578 = vmatpush1.bf16.msra.mxu0 0
        %579 = vmatprep.subr.bf16.mxu0 0
        %580 = vmatpush1.bf16.msra.mxu0 0
        %581 = vmatprep.subr.bf16.mxu0 0
        %582 = vmatpush1.bf16.msra.mxu0 0
        %583 = vmatprep.subr.bf16.mxu0 0
        %584 = vmatpush1.bf16.msra.mxu0 0
        %585 = vmatprep.subr.bf16.mxu0 0
        %586 = vmatpush1.bf16.msra.mxu0 0
        %587 = vmatprep.subr.bf16.mxu0 0
        %588 = vmatpush1.bf16.msra.mxu0 0
        %589 = vmatprep.subr.bf16.mxu0 0
        %590 = vmatpush1.bf16.msra.mxu0 0
        %591 = vmatprep.subr.bf16.mxu0 0
        %592 = vmatpush1.bf16.msra.mxu0 0
        %593 = vmatprep.mubr.bf16.mxu0 0
        %594 = vmatmul.mubr.bf16.gmra.mrb[0].mxu0 %v559
        %v595 = vpop.f32.mrb[0].mxu0
        %v596 = vadd.f32 0.0, %v595
        %v597 = vpop.f32.mrb[0].mxu0
        %v598 = vpop.f32.mrb[0].mxu0
        %v599 = vadd.f32 0.0, %v598
        %v600 = vpop.f32.mrb[0].mxu0
        %601 = vdwg.mxu0
        %v606 = vunpack.c.l.b16 %v538
        %v607 = vunpack.c.l.b16 %v539
        %v608 = vunpack.c.l.b16 %v540
        %v609 = vunpack.c.l.b16 %v541
        %v610 = vpack.c.b16 %v607, %v606
        %v611 = vpack.c.b16 %v609, %v608
        %v615 = vsel %vm521, %v537, 0
        %617 = vmatprep.subr.bf16.mxu0 0
        %618 = vmatpush1.bf16.msra.mxu0 %v610
        %619 = vmatprep.subr.bf16.mxu0 0
        %620 = vmatpush1.bf16.msra.mxu0 %v611
        %621 = vmatprep.subr.bf16.mxu0 0
        %622 = vmatpush1.bf16.msra.mxu0 0
        %623 = vmatprep.subr.bf16.mxu0 0
        %624 = vmatpush1.bf16.msra.mxu0 0
        %625 = vmatprep.subr.bf16.mxu0 0
        %626 = vmatpush1.bf16.msra.mxu0 0
        %627 = vmatprep.subr.bf16.mxu0 0
        %628 = vmatpush1.bf16.msra.mxu0 0
        %629 = vmatprep.subr.bf16.mxu0 0
        %630 = vmatpush1.bf16.msra.mxu0 0
        %631 = vmatprep.subr.bf16.mxu0 0
        %632 = vmatpush1.bf16.msra.mxu0 0
        %633 = vmatprep.subr.bf16.mxu0 0
        %634 = vmatpush1.bf16.msra.mxu0 0
        %635 = vmatprep.subr.bf16.mxu0 0
        %636 = vmatpush1.bf16.msra.mxu0 0
        %637 = vmatprep.subr.bf16.mxu0 0
        %638 = vmatpush1.bf16.msra.mxu0 0
        %639 = vmatprep.subr.bf16.mxu0 0
        %640 = vmatpush1.bf16.msra.mxu0 0
        %641 = vmatprep.subr.bf16.mxu0 0
        %642 = vmatpush1.bf16.msra.mxu0 0
        %643 = vmatprep.subr.bf16.mxu0 0
        %644 = vmatpush1.bf16.msra.mxu0 0
        %645 = vmatprep.subr.bf16.mxu0 0
        %646 = vmatpush1.bf16.msra.mxu0 0
        %647 = vmatprep.subr.bf16.mxu0 0
        %648 = vmatpush1.bf16.msra.mxu0 0
        %649 = vmatprep.mubr.bf16.mxu0 0
        %650 = vmatmul.mubr.bf16.gmra.mrb[0].mxu0 %v615
        %v651 = vpop.f32.mrb[0].mxu0
        %v652 = vadd.f32 %v596, %v651
        %v653 = vpop.f32.mrb[0].mxu0
        %v654 = vpop.f32.mrb[0].mxu0
        %v655 = vadd.f32 %v599, %v654
        %v656 = vpop.f32.mrb[0].mxu0
        %657 = vdwg.mxu0
        %v658 = vld [vmem:[%s6] sm:$0x1]
        %v660 = vlaneseq
        %v661 = vshrl.u32 %v660, 7
        %v662 = vsub.s32 0, %v661
        %v663 = vrot.slane %v658, %v662
        %v665 = vadd.f32 %v652, %v663
        %v666 = vadd.f32 %v655, %v663
        %v667 = vpack.c.bf16 %v666, %v665
        %v668 = vmax.bf16 %v667, 0
        %v669 = vld [vmem:[#allocation5] sm:$0xf]
        %v670 = vld [vmem:[#allocation5 + $0x4] sm:$0xf]
        %v671 = vld [vmem:[#allocation5 + $0x8] sm:$0xf]
        %v672 = vld [vmem:[#allocation5 + $0xc] sm:$0xf]
        %v673 = vld [vmem:[#allocation7] sm:$0x1]
        %v675 = vlaneseq
        %v676 = vshrl.u32 %v675, 7
        %v677 = vsub.s32 0, %v676
        %v678 = vrot.slane %v673, %v677
        %v684 = vunpack.c.l.b16 %v669
        %v685 = vunpack.c.l.b16 %v670
        %v686 = vunpack.c.l.b16 %v671
        %v687 = vunpack.c.l.b16 %v672
        %v688 = vpack.c.b16 %v685, %v684
        %v689 = vpack.c.b16 %v687, %v686
        %v693 = vsel %vm521, %v668, 0
        %695 = vmatprep.subr.bf16.mxu0 0
        %696 = vmatpush1.bf16.msra.mxu0 %v688
        %697 = vmatprep.subr.bf16.mxu0 0
        %698 = vmatpush1.bf16.msra.mxu0 %v689
        %699 = vmatprep.subr.bf16.mxu0 0
        %700 = vmatpush1.bf16.msra.mxu0 0
        %701 = vmatprep.subr.bf16.mxu0 0
        %702 = vmatpush1.bf16.msra.mxu0 0
        %703 = vmatprep.subr.bf16.mxu0 0
        %704 = vmatpush1.bf16.msra.mxu0 0
        %705 = vmatprep.subr.bf16.mxu0 0
        %706 = vmatpush1.bf16.msra.mxu0 0
        %707 = vmatprep.subr.bf16.mxu0 0
        %708 = vmatpush1.bf16.msra.mxu0 0
        %709 = vmatprep.subr.bf16.mxu0 0
        %710 = vmatpush1.bf16.msra.mxu0 0
        %711 = vmatprep.subr.bf16.mxu0 0
        %712 = vmatpush1.bf16.msra.mxu0 0
        %713 = vmatprep.subr.bf16.mxu0 0
        %714 = vmatpush1.bf16.msra.mxu0 0
        %715 = vmatprep.subr.bf16.mxu0 0
        %716 = vmatpush1.bf16.msra.mxu0 0
        %717 = vmatprep.subr.bf16.mxu0 0
        %718 = vmatpush1.bf16.msra.mxu0 0
        %719 = vmatprep.subr.bf16.mxu0 0
        %720 = vmatpush1.bf16.msra.mxu0 0
        %721 = vmatprep.subr.bf16.mxu0 0
        %722 = vmatpush1.bf16.msra.mxu0 0
        %723 = vmatprep.subr.bf16.mxu0 0
        %724 = vmatpush1.bf16.msra.mxu0 0
        %725 = vmatprep.subr.bf16.mxu0 0
        %726 = vmatpush1.bf16.msra.mxu0 0
        %727 = vmatprep.mubr.bf16.mxu0 0
        %728 = vmatmul.mubr.bf16.gmra.mrb[0].mxu0 %v693
        %v729 = vpop.f32.mrb[0].mxu0
        %v730 = vadd.f32 %v678, %v729
        %v731 = vpop.f32.mrb[0].mxu0
        %v732 = vpop.f32.mrb[0].mxu0
        %v733 = vadd.f32 %v678, %v732
        %v734 = vpop.f32.mrb[0].mxu0
        %735 = vdwg.mxu0
        %v736 = vpack.c.bf16 %v733, %v730
        %v737 = vmax.bf16 %v736, 0
        %v738 = vld [vmem:[%s9] sm:$0xf]
        %v739 = vld [vmem:[%s9 + $0x4] sm:$0xf]
        %v740 = vld [vmem:[%s9 + $0x8] sm:$0xf]
        %v741 = vld [vmem:[%s9 + $0xc] sm:$0xf]
        %v742 = vld [vmem:[%s10] sm:$0x1]
        %v744 = vlaneseq
        %v745 = vshrl.u32 %v744, 7
        %v746 = vsub.s32 0, %v745
        %v747 = vrot.slane %v742, %v746
        %v753 = vunpack.c.l.b16 %v738
        %v754 = vunpack.c.l.b16 %v739
        %v755 = vunpack.c.l.b16 %v740
        %v756 = vunpack.c.l.b16 %v741
        %v757 = vpack.c.b16 %v754, %v753
        %v758 = vpack.c.b16 %v756, %v755
        %v762 = vsel %vm521, %v737, 0
        %764 = vmatprep.subr.bf16.mxu0 0
        %765 = vmatpush1.bf16.msra.mxu0 %v757
        %766 = vmatprep.subr.bf16.mxu0 0
        %767 = vmatpush1.bf16.msra.mxu0 %v758
        %768 = vmatprep.subr.bf16.mxu0 0
        %769 = vmatpush1.bf16.msra.mxu0 0
        %770 = vmatprep.subr.bf16.mxu0 0
        %771 = vmatpush1.bf16.msra.mxu0 0
        %772 = vmatprep.subr.bf16.mxu0 0
        %773 = vmatpush1.bf16.msra.mxu0 0
        %774 = vmatprep.subr.bf16.mxu0 0
        %775 = vmatpush1.bf16.msra.mxu0 0
        %776 = vmatprep.subr.bf16.mxu0 0
        %777 = vmatpush1.bf16.msra.mxu0 0
        %778 = vmatprep.subr.bf16.mxu0 0
        %779 = vmatpush1.bf16.msra.mxu0 0
        %780 = vmatprep.subr.bf16.mxu0 0
        %781 = vmatpush1.bf16.msra.mxu0 0
        %782 = vmatprep.subr.bf16.mxu0 0
        %783 = vmatpush1.bf16.msra.mxu0 0
        %784 = vmatprep.subr.bf16.mxu0 0
        %785 = vmatpush1.bf16.msra.mxu0 0
        %786 = vmatprep.subr.bf16.mxu0 0
        %787 = vmatpush1.bf16.msra.mxu0 0
        %788 = vmatprep.subr.bf16.mxu0 0
        %789 = vmatpush1.bf16.msra.mxu0 0
        %790 = vmatprep.subr.bf16.mxu0 0
        %791 = vmatpush1.bf16.msra.mxu0 0
        %792 = vmatprep.subr.bf16.mxu0 0
        %793 = vmatpush1.bf16.msra.mxu0 0
        %794 = vmatprep.subr.bf16.mxu0 0
        %795 = vmatpush1.bf16.msra.mxu0 0
        %796 = vmatprep.mubr.bf16.mxu0 0
        %797 = vmatmul.mubr.bf16.gmra.mrb[0].mxu0 %v762
        %v798 = vpop.f32.mrb[0].mxu0
        %v799 = vadd.f32 %v747, %v798
        %v800 = vpop.f32.mrb[0].mxu0
        %v801 = vpop.f32.mrb[0].mxu0
        %v802 = vadd.f32 %v747, %v801
        %v803 = vpop.f32.mrb[0].mxu0
        %804 = vdwg.mxu0
        %v805 = vtanh.pop %v799
        %v806 = vtanh.pop %v802
        %807 = vst [vmem:[%s438] sm:$0xff] %v805
        %808 = vst [vmem:[%s438 + $0x8] sm:$0xff] %v806
        %s809 = sand.u32 %s276, 1
        %s810 = scalar_lea.sflag [#allocation4], %s809
        %s811 = sand.u32 %s276, 1
        %s812 = smul.addr %s811, 16
        %s813 = scalar_lea.vmem [#allocation8], %s812
        // Predicated region
        $region77: #{tpu_custom_call.1} parent=63 // pred_check
          %p814 = pneg %p286
        $region78: #{tpu_custom_call.1} parent=63 // pred_check_branch
          %816 = sbr.rel (%p814) target = $region80
        $region79: #{tpu_custom_call.1} parent=63 // pred_region
          %s817 = smul.u32 2, %s27
          %s819 = ssub.s32 256, 256
          %820 = vsyncadd %s810, %s819
          %s821 = smul.addr %s817, 128
          %s822 = scalar_lea.hbm %s11, %s821
          %s823 = sshll.u32 %s813, 4
          %s824 = int_to_ptr.vmem [resolvable:$true] %s823
          %829 = dma.vmem_to_hbm [thread:$0]  %s824, 256, %s822, %s810, 128, 128, 8
        $region80: #{tpu_custom_call.1} parent=63 // pred_fallthru
          _
      $region64: #{tpu_custom_call.1} parent=5 // pred_fallthru
        _
      %p830 = scmp.le.s32.totalorder 2, %s22
      // Predicated region
      $region81: #{tpu_custom_call.1} parent=5 // pred_check
        %p831 = pneg %p830
      $region82: #{tpu_custom_call.1} parent=5 // pred_check_branch
        %833 = sbr.rel (%p831) target = $region84
      $region83: #{tpu_custom_call.1} parent=5 // pred_region
        %s834 = ssub.s32 %s22, 2
        // Predicated region
        $region85: #{tpu_custom_call.1} parent=83 // pred_check
          %p835 = pneg %p292
        $region86: #{tpu_custom_call.1} parent=83 // pred_check_branch
          %837 = sbr.rel (%p835) target = $region88
        $region87: #{tpu_custom_call.1} parent=83 // pred_region
          %s838 = sand.u32 %s277, 1
          %s839 = scalar_lea.sflag [#allocation4], %s838
          %s840 = sand.u32 %s277, 1
          %s841 = smul.addr %s840, 16
          %s842 = scalar_lea.vmem [#allocation8], %s841
          %843 = dma.done %s839, 256
        $region88: #{tpu_custom_call.1} parent=83 // pred_fallthru
          _
      $region84: #{tpu_custom_call.1} parent=5 // pred_fallthru
        _
    $region6: #{tpu_custom_call.1} parent=1 // loop_footer
      %s26 = sadd.s32 1, %s22
    $region7: #{tpu_custom_call.1} parent=1 // loop_footer_branch
      %21 = sbr.rel target = $region3
    $region8: #{tpu_custom_call.1} parent=1 // loop_exit
      _
    %844 = vsyncpa [#allocation3], 1
    %s845 = scalar_lea.sflag [#allocation3], 1
    %846 = vsyncpa %s845, 1
    %847 = vsyncpa [#allocation6], 1
    %848 = vsyncpa [#allocation4], 1
    %s849 = scalar_lea.sflag [#allocation4], 1
    %850 = vsyncpa %s849, 1

</llo_original>
